<compile_context>
chip_gen: v5e
topology: v5e:2x2
jax: 0.10.0
libtpu: 0.0.40
codegen_flags: <defaults>
</compile_context>

<pallas_src>
from collections import namedtuple

import jax
import jax.numpy as jnp
from jax.experimental import pallas as pl
from jax.experimental.pallas import tpu as pltpu

Genotype = namedtuple("Genotype", "normal normal_concat reduce reduce_concat")

GENOTYPE = Genotype(
    normal=[
        ("sep_conv_3x3", 0), ("skip_connect", 1),
        ("sep_conv_3x3", 1), ("skip_connect", 0),
        ("avg_pool_3x3", 1), ("skip_connect", 0),
        ("max_pool_3x3", 0), ("skip_connect", 2),
    ],
    normal_concat=[2, 3, 4, 5],
    reduce=[],
    reduce_concat=[],
)

BN_EPS = 1e-5


def _bn_fold(C):
    """Freshly-initialized BatchNorm2d (gamma=1, beta=0, mean=0, var=1) -> (scale, bias)."""
    gamma = jnp.ones((C,), jnp.float32)
    beta = jnp.zeros((C,), jnp.float32)
    mean = jnp.zeros((C,), jnp.float32)
    var = jnp.ones((C,), jnp.float32)
    scale = gamma / jnp.sqrt(var + BN_EPS)
    bias = beta - mean * scale
    return scale, bias


# ------------------------------------------------------------------ fused cell kernel

def _make_cell_kernel(op_names, indices, concat, sep_slot, B_TILE, H, W, C):
    """Fused-cell kernel for a fixed (static) genotype / tile size.

    Activations are carried lane-dense as (M, W*C) with M = B_TILE*H (batch tile folded into
    the matmul M dimension).  Only Python scalars are closed over -- no captured jnp constants.
    """
    WC = W * C
    M = B_TILE * H
    n_steps = len(op_names) // 2
    concat = tuple(concat)
    NEG = float("-inf")          # Python float -> jaxpr literal, not a captured constant

    def kernel(s0_ref, s1_ref, wpre0_ref, wpre1_ref, bpre_ref,
               msep_ref, bsep_ref, out_ref):
        # Masks built in-kernel from iota (traced, so never hoisted as consts).
        row = jax.lax.broadcasted_iota(jnp.int32, (M, WC), 0)
        col = jax.lax.broadcasted_iota(jnp.int32, (M, WC), 1)
        is_top = (row % H) == 0            # first spatial row of each sample in the tile
        is_bot = (row % H) == (H - 1)      # last spatial row of each sample
        is_lft = col < C                   # w == 0      (packed (w, c) lane layout)
        is_rgt = col >= (W - 1) * C        # w == W - 1

        def shift_rows(x, fill):
            # up[r] = x[r-1], dn[r] = x[r+1]; `fill` outside each sample's own H rows.
            frow = jnp.full((1, WC), fill, x.dtype)
            up = jnp.concatenate([frow, x[:M - 1, :]], axis=0)
            dn = jnp.concatenate([x[1:, :], frow], axis=0)
            up = jnp.where(is_top, fill, up)     # no leakage across sample boundaries
            dn = jnp.where(is_bot, fill, dn)
            return up, dn

        def shift_cols(x, fill):
            # lf[:, w] = x[:, w-1], rt[:, w] = x[:, w+1]; `fill` outside [0, W).
            fcol = jnp.full((M, C), fill, x.dtype)
            lf = jnp.concatenate([fcol, x[:, :WC - C]], axis=1)
            rt = jnp.concatenate([x[:, C:], fcol], axis=1)
            return lf, rt

        def relu_conv_bn(x, w_ref, b):
            # ReLU -> 1x1 conv (block-diagonal, BN scale folded) -> +bias.  bf16 MXU operands.
            y = jnp.dot(jnp.maximum(x, 0.0).astype(jnp.bfloat16), w_ref[...],
                        preferred_element_type=jnp.float32)
            return y + b

        def sep_conv_stage(x, k):
            # ReLU -> depthwise3x3 -> 1x1 -> BN as ONE (M, 3*WC) x (3*WC, WC) bf16 matmul.
            xr = jnp.maximum(x, 0.0)
            up, dn = shift_rows(xr, 0.0)
            lhs = jnp.concatenate([up, xr, dn], axis=1).astype(jnp.bfloat16)   # K = 3*WC
            y = jnp.dot(lhs, msep_ref[k], preferred_element_type=jnp.float32)
            return y + bsep_ref[k]

        def sep_conv_3x3(x, slot):
            k = 2 * slot
            return sep_conv_stage(sep_conv_stage(x, k), k + 1)

        def avg_pool_3x3(x):
            # count_include_pad=False: sum over valid taps, multiply by 1/(valid_r*valid_c).
            up, dn = shift_rows(x, 0.0)
            rsum = up + x + dn
            lf, rt = shift_cols(rsum, 0.0)
            s = lf + rsum + rt
            inv_r = jnp.where(is_top | is_bot, 0.5, 1.0 / 3.0)
            inv_c = jnp.where(is_lft | is_rgt, 0.5, 1.0 / 3.0)
            return s * (inv_r * inv_c)

        def max_pool_3x3(x):
            up, dn = shift_rows(x, NEG)
            m = jnp.maximum(jnp.maximum(up, x), dn)
            lf, rt = shift_cols(m, NEG)
            return jnp.maximum(jnp.maximum(lf, m), rt)

        # preprocess0 / preprocess1: ReLUConvBN(C_in, C, 1, 1, 0)
        p0 = relu_conv_bn(s0_ref[...].reshape(M, -1), wpre0_ref, bpre_ref[0])
        p1 = relu_conv_bn(s1_ref[...].reshape(M, -1), wpre1_ref, bpre_ref[1])

        live = {}  # fallback store for intermediate states that are NOT in the concat

        def get_state(idx):
            if idx == 0:
                return p0
            if idx == 1:
                return p1
            if idx in live:
                return live[idx]
            # Eagerly written to its concat slice earlier -> read back from the VMEM out block.
            return out_ref[:, concat.index(idx)].reshape(M, WC)

        for i in range(n_steps):
            hs = []
            for j in (2 * i, 2 * i + 1):
                name = op_names[j]
                x = get_state(indices[j])
                if name == "sep_conv_3x3":
                    hs.append(sep_conv_3x3(x, sep_slot[j]))
                elif name == "skip_connect":
                    hs.append(x)                      # Identity (stride 1)
                elif name == "avg_pool_3x3":
                    hs.append(avg_pool_3x3(x))
                elif name == "max_pool_3x3":
                    hs.append(max_pool_3x3(x))
                else:
                    raise NotImplementedError(f"unsupported op {name}")
            # drop_path is a no-op on the eval / drop_prob == 0 path reproduced here.
            s = hs[0] + hs[1]
            new_idx = 2 + i
            if new_idx in concat:
                # Eager write-out keeps vreg pressure bounded (state lives in the VMEM block).
                out_ref[:, concat.index(new_idx)] = s.reshape(B_TILE, H, WC)
            else:
                live[new_idx] = s

        # torch.cat(states[concat], dim=1): fill any concat slot that is a pre-state.
        for m_pos, ci in enumerate(concat):
            if ci < 2:
                out_ref[:, m_pos] = get_state(ci).reshape(B_TILE, H, WC)

    return kernel


def _pick_b_tile(N, H):
    """Largest batch tile that divides N, keeps M = B_TILE*H <= 128 and grid >= 2 (if N >= 2)."""
    best = 1
    for bt in range(1, N + 1):
        if N % bt:
            continue
        if bt * H > 128:
            continue
        if N >= 2 and (N // bt) < 2:
            continue
        best = bt
    return best


# ------------------------------------------------------------------ module wrapper

class PallasCell:
    """Pallas port of fedex_model.Cell (normal cell: reduction=False, reduction_prev=False)."""

    def __init__(self, genotype, C_prev_prev, C_prev, C, key):
        op_names, indices = zip(*genotype.normal)
        assert len(op_names) == len(indices)
        self._op_names = op_names
        self._indices = indices
        self._concat = tuple(genotype.normal_concat)
        self._steps = len(op_names) // 2
        self.multiplier = len(self._concat)
        self.C_prev_prev, self.C_prev, self.C = C_prev_prev, C_prev, C

        def conv_w(k, cin, cout, s=0.1):
            return s * jax.random.normal(k, (cin, cout), jnp.float32)

        def dw_w(k, c, s=0.1):
            return s * jax.random.normal(k, (9, c), jnp.float32)

        k_pre0, k_pre1, k_ops = jax.random.split(key, 3)

        # ReLUConvBN: fold the BN scale into the 1x1 weights, keep only a per-channel bias.
        sc0, b0 = _bn_fold(C)
        self.pre0_w = conv_w(k_pre0, C_prev_prev, C) * sc0[None, :]
        self.pre0_b = b0
        sc1, b1 = _bn_fold(C)
        self.pre1_w = conv_w(k_pre1, C_prev, C) * sc1[None, :]
        self.pre1_b = b1

        # SepConv3x3 = two stages of (ReLU, depthwise3x3, 1x1 conv, BN); BN scale folded into pw.
        self._sep_slot = {}
        self.sep_dw, self.sep_pw, self.sep_b = [], [], []
        for j, name in enumerate(op_names):
            if name != "sep_conv_3x3":
                continue
            self._sep_slot[j] = len(self.sep_dw) // 2
            for stage in range(2):
                kd, kp = jax.random.split(jax.random.fold_in(k_ops, 2 * j + stage))
                sc, bi = _bn_fold(C)
                self.sep_dw.append(dw_w(kd, C))                     # (9, C) depthwise taps
                self.sep_pw.append(conv_w(kp, C, C) * sc[None, :])  # (Cin, Cout), scale folded
                self.sep_b.append(bi)                               # (C,)
        self._n_sep = len(self.sep_dw) // 2

    # ---- packed-layout forward: s0p/s1p are (N, H, W*Cin) lane-dense activations -------------
    def apply_packed(self, s0p, s1p, H, W):
        N = s0p.shape[0]
        C = self.C
        WC = W * C
        Cpp, Cp = self.C_prev_prev, self.C_prev
        assert H >= 2 and W >= 2

        eyeW = jnp.eye(W, dtype=jnp.float32)
        eyeC = jnp.eye(C, dtype=jnp.float32)
        del eyeC  # (kept implicit in kron forms below)

        def blockdiag(w):          # (Cin, Cout) -> (W*Cin, W*Cout)
            return jnp.kron(eyeW, w)

        def tile_lane(v):          # (Cout,) -> (1, W*Cout)
            return jnp.tile(v, W)[None, :]

        def shift_eye(dwr):        # ones at [w_out + dwr, w_out] (zero padding in w)
            return jnp.eye(W, k=-dwr, dtype=jnp.float32)

        # 1x1 preprocess weights, BN folded, stored bf16 for the MXU.
        w_pre0 = blockdiag(self.pre0_w).astype(jnp.bfloat16)                    # (W*Cpp, WC)
        w_pre1 = blockdiag(self.pre1_w).astype(jnp.bfloat16)                    # (W*Cp , WC)
        b_pre = jnp.stack([tile_lane(self.pre0_b), tile_lane(self.pre1_b)])     # (2, 1, WC) f32

        # SepConv stage -> ONE (3*WC, WC) matrix: K-concat of the three per-dh banded matrices
        # (order matches the kernel's lhs concat: [row h-1, row h, row h+1]).
        m_sep_list, b_sep_list = [], []
        for d, p in zip(self.sep_dw, self.sep_pw):
            per_dh = []
            for dh in range(3):
                m = jnp.zeros((WC, WC), jnp.float32)
                for dw in range(3):
                    m = m + jnp.kron(shift_eye(dw - 1), d[dh * 3 + dw][:, None] * p)
                per_dh.append(m)
            m_sep_list.append(jnp.concatenate(per_dh, axis=0))                  # (3*WC, WC)
            b_sep_list.append(None)
        if self._n_sep == 0:
            m_sep = jnp.zeros((1, 3 * WC, WC), jnp.bfloat16)
            b_sep = jnp.zeros((1, 1, WC), jnp.float32)
            n_pw = 1
        else:
            m_sep = jnp.stack(m_sep_list).astype(jnp.bfloat16)                  # (2*n_sep,3WC,WC)
            b_sep = jnp.stack([tile_lane(b) for b in self.sep_b])               # (2*n_sep,1,WC)
            n_pw = 2 * self._n_sep

        B_TILE = _pick_b_tile(N, H)
        grid = (N // B_TILE,)

        kernel = _make_cell_kernel(self._op_names, self._indices, self._concat,
                                   self._sep_slot, B_TILE, H, W, C)

        out = pl.pallas_call(
            kernel,
            out_shape=jax.ShapeDtypeStruct((N, self.multiplier, H, WC), jnp.float32),
            grid=grid,
            in_specs=[
                pl.BlockSpec((B_TILE, H, W * Cpp), lambda n: (n, 0, 0)),
                pl.BlockSpec((B_TILE, H, W * Cp), lambda n: (n, 0, 0)),
                pl.BlockSpec((W * Cpp, WC), lambda n: (0, 0)),
                pl.BlockSpec((W * Cp, WC), lambda n: (0, 0)),
                pl.BlockSpec((2, 1, WC), lambda n: (0, 0, 0)),
                pl.BlockSpec((n_pw, 3 * WC, WC), lambda n: (0, 0, 0)),
                pl.BlockSpec((n_pw, 1, WC), lambda n: (0, 0, 0)),
            ],
            out_specs=pl.BlockSpec((B_TILE, self.multiplier, H, WC),
                                   lambda n: (n, 0, 0, 0)),
            compiler_params=pltpu.CompilerParams(
                dimension_semantics=("parallel",)),    # batch tiles shard across TCs on v7x
        )(s0p, s1p, w_pre0, w_pre1, b_pre, m_sep, b_sep)
        return out                                      # (N, multiplier, H, W*C)

    # ---- NCHW boundary wrapper (demo path) ---------------------------------------------------
    def __call__(self, s0_nchw, s1_nchw, drop_prob=0.0):
        # TODO(synk): drop_path not implemented; eval / drop_prob == 0 forward only.
        del drop_prob
        N, Cpp, H, W = s0_nchw.shape
        _, Cp, H1, W1 = s1_nchw.shape
        assert (H, W) == (H1, W1) and Cpp == self.C_prev_prev and Cp == self.C_prev
        C = self.C

        def pack(x):   # NCHW -> lane-dense (N, H, W*Cin)
            n, c, h, w = x.shape
            return jnp.transpose(x, (0, 2, 3, 1)).reshape(n, h, w * c).astype(jnp.float32)

        out = self.apply_packed(pack(s0_nchw), pack(s1_nchw), H, W)

        # (N, k, H, W*C) -> (N, k*C, H, W)  == torch.cat([...], dim=1) in NCHW.
        out = out.reshape(N, self.multiplier, H, W, C)
        out = jnp.transpose(out, (0, 1, 4, 2, 3)).reshape(N, self.multiplier * C, H, W)
        return out


# ------------------------------------------------------------------ main

if __name__ == "__main__":
    key = jax.random.PRNGKey(0)
    k_cell, k0, k1 = jax.random.split(key, 3)

    # W * C = 16 * 8 = 128 -> fully-populated lanes; N=8 -> B_TILE=4 (M=64 matmul rows), grid=2.
    N, C_prev_prev, C_prev, C, H, W = 8, 8, 8, 8, 16, 16
    cell = PallasCell(GENOTYPE, C_prev_prev, C_prev, C, k_cell)

    s0 = jax.random.normal(k0, (N, C_prev_prev, H, W), jnp.float32)
    s1 = jax.random.normal(k1, (N, C_prev, H, W), jnp.float32)

    out = cell(s0, s1, drop_prob=0.0)
    out = jax.block_until_ready(out)

    expected = (N, cell.multiplier * C, H, W)
    assert out.shape == expected, (out.shape, expected)
    assert bool(jnp.all(jnp.isfinite(out)))
    print("KERNEL_OK")
</pallas_src>

<mosaic_0001>
module attributes {stable_mosaic.version = 11 : i64} {
  func.func @kernel(%arg0: i32, %arg1: memref<4x16x128xf32, #tpu.memory_space<vmem>>, %arg2: memref<4x16x128xf32, #tpu.memory_space<vmem>>, %arg3: memref<128x128xbf16, #tpu.memory_space<vmem>>, %arg4: memref<128x128xbf16, #tpu.memory_space<vmem>>, %arg5: memref<2x1x128xf32, #tpu.memory_space<vmem>>, %arg6: memref<4x384x128xbf16, #tpu.memory_space<vmem>>, %arg7: memref<4x1x128xf32, #tpu.memory_space<vmem>>, %arg8: memref<4x4x16x128xf32, #tpu.memory_space<vmem>>) attributes {dimension_semantics = [#tpu.dimension_semantics<parallel>], iteration_bounds = array<i64: 2>, scalar_prefetch = 0 : i64, scratch_operands = 0 : i64, tpu.core_type = #tpu.core_type<tc>, window_params = [{transform_indices = @transform_0, window_bounds = array<i64: 4, 16, 128>}, {transform_indices = @transform_1, window_bounds = array<i64: 4, 16, 128>}, {pipeline_mode = #tpu.pipeline_mode<synchronous>, transform_indices = @transform_2, window_bounds = array<i64: 128, 128>}, {pipeline_mode = #tpu.pipeline_mode<synchronous>, transform_indices = @transform_3, window_bounds = array<i64: 128, 128>}, {pipeline_mode = #tpu.pipeline_mode<synchronous>, transform_indices = @transform_4, window_bounds = array<i64: 2, 1, 128>}, {pipeline_mode = #tpu.pipeline_mode<synchronous>, transform_indices = @transform_5, window_bounds = array<i64: 4, 384, 128>}, {pipeline_mode = #tpu.pipeline_mode<synchronous>, transform_indices = @transform_6, window_bounds = array<i64: 4, 1, 128>}, {transform_indices = @transform_7, window_bounds = array<i64: 4, 4, 16, 128>}]} {
    %0 = tpu.iota {dimensions = array<i32: 0>} : vector<64x128xi32>
    %1 = tpu.iota {dimensions = array<i32: 1>} : vector<64x128xi32>
    %c16_i32 = arith.constant 16 : i32
    %c0_i32 = arith.constant 0 : i32
    %2 = arith.cmpi eq, %c16_i32, %c0_i32 : i32
    %c1_i32 = arith.constant 1 : i32
    %3 = arith.select %2, %c1_i32, %c16_i32 : i32
    %4 = vector.broadcast %3 : i32 to vector<64x128xi32>
    %5 = arith.remsi %0, %4 : vector<64x128xi32>
    %c0_i32_0 = arith.constant 0 : i32
    %6 = vector.broadcast %c0_i32_0 : i32 to vector<64x128xi32>
    %7 = arith.cmpi ne, %5, %6 : vector<64x128xi32>
    %c0_i32_1 = arith.constant 0 : i32
    %8 = vector.broadcast %c0_i32_1 : i32 to vector<64x128xi32>
    %9 = arith.cmpi slt, %5, %8 : vector<64x128xi32>
    %c0_i32_2 = arith.constant 0 : i32
    %10 = arith.cmpi slt, %3, %c0_i32_2 : i32
    %11 = vector.broadcast %10 : i1 to vector<64x128xi1>
    %12 = vector.broadcast %11 : vector<64x128xi1> to vector<64x128xi1>
    %13 = arith.xori %9, %12 : vector<64x128xi1>
    %14 = arith.andi %13, %7 : vector<64x128xi1>
    %15 = vector.broadcast %3 : i32 to vector<64x128xi32>
    %16 = arith.addi %5, %15 : vector<64x128xi32>
    %17 = arith.select %14, %16, %5 : vector<64x128xi1>, vector<64x128xi32>
    %c0_i32_3 = arith.constant 0 : i32
    %18 = vector.broadcast %c0_i32_3 : i32 to vector<64x128xi32>
    %19 = arith.cmpi eq, %17, %18 : vector<64x128xi32>
    %c16_i32_4 = arith.constant 16 : i32
    %c0_i32_5 = arith.constant 0 : i32
    %20 = arith.cmpi eq, %c16_i32_4, %c0_i32_5 : i32
    %c1_i32_6 = arith.constant 1 : i32
    %21 = arith.select %20, %c1_i32_6, %c16_i32_4 : i32
    %22 = vector.broadcast %21 : i32 to vector<64x128xi32>
    %23 = arith.remsi %0, %22 : vector<64x128xi32>
    %c0_i32_7 = arith.constant 0 : i32
    %24 = vector.broadcast %c0_i32_7 : i32 to vector<64x128xi32>
    %25 = arith.cmpi ne, %23, %24 : vector<64x128xi32>
    %c0_i32_8 = arith.constant 0 : i32
    %26 = vector.broadcast %c0_i32_8 : i32 to vector<64x128xi32>
    %27 = arith.cmpi slt, %23, %26 : vector<64x128xi32>
    %c0_i32_9 = arith.constant 0 : i32
    %28 = arith.cmpi slt, %21, %c0_i32_9 : i32
    %29 = vector.broadcast %28 : i1 to vector<64x128xi1>
    %30 = vector.broadcast %29 : vector<64x128xi1> to vector<64x128xi1>
    %31 = arith.xori %27, %30 : vector<64x128xi1>
    %32 = arith.andi %31, %25 : vector<64x128xi1>
    %33 = vector.broadcast %21 : i32 to vector<64x128xi32>
    %34 = arith.addi %23, %33 : vector<64x128xi32>
    %35 = arith.select %32, %34, %23 : vector<64x128xi1>, vector<64x128xi32>
    %c15_i32 = arith.constant 15 : i32
    %36 = vector.broadcast %c15_i32 : i32 to vector<64x128xi32>
    %37 = arith.cmpi eq, %35, %36 : vector<64x128xi32>
    %c8_i32 = arith.constant 8 : i32
    %38 = vector.broadcast %c8_i32 : i32 to vector<64x128xi32>
    %39 = arith.cmpi slt, %1, %38 : vector<64x128xi32>
    %c120_i32 = arith.constant 120 : i32
    %40 = vector.broadcast %c120_i32 : i32 to vector<64x128xi32>
    %41 = arith.cmpi sge, %1, %40 : vector<64x128xi32>
    %c0 = arith.constant 0 : index
    %c0_10 = arith.constant 0 : index
    %c0_11 = arith.constant 0 : index
    %42 = vector.load %arg1[%c0, %c0_10, %c0_11] : memref<4x16x128xf32, #tpu.memory_space<vmem>>, vector<4x16x128xf32>
    %43 = vector.shape_cast %42 : vector<4x16x128xf32> to vector<64x128xf32>
    %c0_12 = arith.constant 0 : index
    %c0_13 = arith.constant 0 : index
    %c0_14 = arith.constant 0 : index
    %44 = vector.load %arg5[%c0_12, %c0_13, %c0_14] : memref<2x1x128xf32, #tpu.memory_space<vmem>>, vector<1x1x128xf32>
    %45 = vector.shape_cast %44 : vector<1x1x128xf32> to vector<1x128xf32>
    %cst = arith.constant 0.000000e+00 : f32
    %46 = vector.broadcast %cst : f32 to vector<64x128xf32>
    %47 = arith.maximumf %43, %46 : vector<64x128xf32>
    %48 = arith.truncf %47 : vector<64x128xf32> to vector<64x128xbf16>
    %c0_15 = arith.constant 0 : index
    %c0_16 = arith.constant 0 : index
    %49 = vector.load %arg3[%c0_15, %c0_16] : memref<128x128xbf16, #tpu.memory_space<vmem>>, vector<128x128xbf16>
    %cst_17 = arith.constant dense<0.000000e+00> : vector<64x128xf32>
    %50 = tpu.matmul %48, %49, %cst_17 {dimension_numbers = #tpu.dot_dimension_numbers<[1], [0], [0], [1], [0, 0, 1, 1], [], []>} : vector<64x128xbf16>, vector<128x128xbf16>, vector<64x128xf32> -> vector<64x128xf32>
    %51 = vector.broadcast %45 : vector<1x128xf32> to vector<64x128xf32>
    %52 = arith.addf %50, %51 : vector<64x128xf32>
    %c0_18 = arith.constant 0 : index
    %c0_19 = arith.constant 0 : index
    %c0_20 = arith.constant 0 : index
    %53 = vector.load %arg2[%c0_18, %c0_19, %c0_20] : memref<4x16x128xf32, #tpu.memory_space<vmem>>, vector<4x16x128xf32>
    %54 = vector.shape_cast %53 : vector<4x16x128xf32> to vector<64x128xf32>
    %c1 = arith.constant 1 : index
    %c0_21 = arith.constant 0 : index
    %c0_22 = arith.constant 0 : index
    %55 = vector.load %arg5[%c1, %c0_21, %c0_22] : memref<2x1x128xf32, #tpu.memory_space<vmem>>, vector<1x1x128xf32>
    %56 = vector.shape_cast %55 : vector<1x1x128xf32> to vector<1x128xf32>
    %cst_23 = arith.constant 0.000000e+00 : f32
    %57 = vector.broadcast %cst_23 : f32 to vector<64x128xf32>
    %58 = arith.maximumf %54, %57 : vector<64x128xf32>
    %59 = arith.truncf %58 : vector<64x128xf32> to vector<64x128xbf16>
    %c0_24 = arith.constant 0 : index
    %c0_25 = arith.constant 0 : index
    %60 = vector.load %arg4[%c0_24, %c0_25] : memref<128x128xbf16, #tpu.memory_space<vmem>>, vector<128x128xbf16>
    %cst_26 = arith.constant dense<0.000000e+00> : vector<64x128xf32>
    %61 = tpu.matmul %59, %60, %cst_26 {dimension_numbers = #tpu.dot_dimension_numbers<[1], [0], [0], [1], [0, 0, 1, 1], [], []>} : vector<64x128xbf16>, vector<128x128xbf16>, vector<64x128xf32> -> vector<64x128xf32>
    %62 = vector.broadcast %56 : vector<1x128xf32> to vector<64x128xf32>
    %63 = arith.addf %61, %62 : vector<64x128xf32>
    %cst_27 = arith.constant 0.000000e+00 : f32
    %64 = vector.broadcast %cst_27 : f32 to vector<64x128xf32>
    %65 = arith.maximumf %52, %64 : vector<64x128xf32>
    %cst_28 = arith.constant 0.000000e+00 : f32
    %66 = vector.broadcast %cst_28 : f32 to vector<1x128xf32>
    %67 = vector.extract_strided_slice %65 {offsets = [0, 0], sizes = [63, 128], strides = [1, 1]} : vector<64x128xf32> to vector<63x128xf32>
    %68 = tpu.concatenate %66, %67 in 0 : vector<1x128xf32>, vector<63x128xf32> -> vector<64x128xf32>
    %69 = vector.extract_strided_slice %65 {offsets = [1, 0], sizes = [63, 128], strides = [1, 1]} : vector<64x128xf32> to vector<63x128xf32>
    %70 = tpu.concatenate %69, %66 in 0 : vector<63x128xf32>, vector<1x128xf32> -> vector<64x128xf32>
    %cst_29 = arith.constant 0.000000e+00 : f32
    %71 = vector.broadcast %cst_29 : f32 to vector<64x128xf32>
    %72 = arith.select %19, %71, %68 : vector<64x128xi1>, vector<64x128xf32>
    %cst_30 = arith.constant 0.000000e+00 : f32
    %73 = vector.broadcast %cst_30 : f32 to vector<64x128xf32>
    %74 = arith.select %37, %73, %70 : vector<64x128xi1>, vector<64x128xf32>
    %75 = tpu.concatenate %72, %65, %74 in 1 : vector<64x128xf32>, vector<64x128xf32>, vector<64x128xf32> -> vector<64x384xf32>
    %76 = arith.truncf %75 : vector<64x384xf32> to vector<64x384xbf16>
    %c0_31 = arith.constant 0 : index
    %c0_32 = arith.constant 0 : index
    %c0_33 = arith.constant 0 : index
    %77 = vector.load %arg6[%c0_31, %c0_32, %c0_33] : memref<4x384x128xbf16, #tpu.memory_space<vmem>>, vector<1x384x128xbf16>
    %78 = vector.shape_cast %77 : vector<1x384x128xbf16> to vector<384x128xbf16>
    %cst_34 = arith.constant dense<0.000000e+00> : vector<64x128xf32>
    %79 = tpu.matmul %76, %78, %cst_34 {dimension_numbers = #tpu.dot_dimension_numbers<[1], [0], [0], [1], [0, 0, 1, 1], [], []>} : vector<64x384xbf16>, vector<384x128xbf16>, vector<64x128xf32> -> vector<64x128xf32>
    %c0_35 = arith.constant 0 : index
    %c0_36 = arith.constant 0 : index
    %c0_37 = arith.constant 0 : index
    %80 = vector.load %arg7[%c0_35, %c0_36, %c0_37] : memref<4x1x128xf32, #tpu.memory_space<vmem>>, vector<1x1x128xf32>
    %81 = vector.shape_cast %80 : vector<1x1x128xf32> to vector<1x128xf32>
    %82 = vector.broadcast %81 : vector<1x128xf32> to vector<64x128xf32>
    %83 = arith.addf %79, %82 : vector<64x128xf32>
    %cst_38 = arith.constant 0.000000e+00 : f32
    %84 = vector.broadcast %cst_38 : f32 to vector<64x128xf32>
    %85 = arith.maximumf %83, %84 : vector<64x128xf32>
    %cst_39 = arith.constant 0.000000e+00 : f32
    %86 = vector.broadcast %cst_39 : f32 to vector<1x128xf32>
    %87 = vector.extract_strided_slice %85 {offsets = [0, 0], sizes = [63, 128], strides = [1, 1]} : vector<64x128xf32> to vector<63x128xf32>
    %88 = tpu.concatenate %86, %87 in 0 : vector<1x128xf32>, vector<63x128xf32> -> vector<64x128xf32>
    %89 = vector.extract_strided_slice %85 {offsets = [1, 0], sizes = [63, 128], strides = [1, 1]} : vector<64x128xf32> to vector<63x128xf32>
    %90 = tpu.concatenate %89, %86 in 0 : vector<63x128xf32>, vector<1x128xf32> -> vector<64x128xf32>
    %cst_40 = arith.constant 0.000000e+00 : f32
    %91 = vector.broadcast %cst_40 : f32 to vector<64x128xf32>
    %92 = arith.select %19, %91, %88 : vector<64x128xi1>, vector<64x128xf32>
    %cst_41 = arith.constant 0.000000e+00 : f32
    %93 = vector.broadcast %cst_41 : f32 to vector<64x128xf32>
    %94 = arith.select %37, %93, %90 : vector<64x128xi1>, vector<64x128xf32>
    %95 = tpu.concatenate %92, %85, %94 in 1 : vector<64x128xf32>, vector<64x128xf32>, vector<64x128xf32> -> vector<64x384xf32>
    %96 = arith.truncf %95 : vector<64x384xf32> to vector<64x384xbf16>
    %c1_42 = arith.constant 1 : index
    %c0_43 = arith.constant 0 : index
    %c0_44 = arith.constant 0 : index
    %97 = vector.load %arg6[%c1_42, %c0_43, %c0_44] : memref<4x384x128xbf16, #tpu.memory_space<vmem>>, vector<1x384x128xbf16>
    %98 = vector.shape_cast %97 : vector<1x384x128xbf16> to vector<384x128xbf16>
    %cst_45 = arith.constant dense<0.000000e+00> : vector<64x128xf32>
    %99 = tpu.matmul %96, %98, %cst_45 {dimension_numbers = #tpu.dot_dimension_numbers<[1], [0], [0], [1], [0, 0, 1, 1], [], []>} : vector<64x384xbf16>, vector<384x128xbf16>, vector<64x128xf32> -> vector<64x128xf32>
    %c1_46 = arith.constant 1 : index
    %c0_47 = arith.constant 0 : index
    %c0_48 = arith.constant 0 : index
    %100 = vector.load %arg7[%c1_46, %c0_47, %c0_48] : memref<4x1x128xf32, #tpu.memory_space<vmem>>, vector<1x1x128xf32>
    %101 = vector.shape_cast %100 : vector<1x1x128xf32> to vector<1x128xf32>
    %102 = vector.broadcast %101 : vector<1x128xf32> to vector<64x128xf32>
    %103 = arith.addf %99, %102 : vector<64x128xf32>
    %104 = arith.addf %103, %63 : vector<64x128xf32>
    %105 = vector.shape_cast %104 : vector<64x128xf32> to vector<4x16x128xf32>
    %c0_49 = arith.constant 0 : index
    %c0_50 = arith.constant 0 : index
    %c0_51 = arith.constant 0 : index
    %c0_52 = arith.constant 0 : index
    %106 = vector.load %arg8[%c0_49, %c0_50, %c0_51, %c0_52] : memref<4x4x16x128xf32, #tpu.memory_space<vmem>>, vector<4x1x16x128xf32>
    %107 = vector.shape_cast %106 : vector<4x1x16x128xf32> to vector<4x16x128xf32>
    %108 = vector.shape_cast %105 : vector<4x16x128xf32> to vector<4x1x16x128xf32>
    tpu.vector_store %arg8[%c0_49, %c0_50, %c0_51, %c0_52], %108 {strides = array<i32>} : memref<4x4x16x128xf32, #tpu.memory_space<vmem>>, vector<4x1x16x128xf32>,
    %cst_53 = arith.constant 0.000000e+00 : f32
    %109 = vector.broadcast %cst_53 : f32 to vector<64x128xf32>
    %110 = arith.maximumf %63, %109 : vector<64x128xf32>
    %cst_54 = arith.constant 0.000000e+00 : f32
    %111 = vector.broadcast %cst_54 : f32 to vector<1x128xf32>
    %112 = vector.extract_strided_slice %110 {offsets = [0, 0], sizes = [63, 128], strides = [1, 1]} : vector<64x128xf32> to vector<63x128xf32>
    %113 = tpu.concatenate %111, %112 in 0 : vector<1x128xf32>, vector<63x128xf32> -> vector<64x128xf32>
    %114 = vector.extract_strided_slice %110 {offsets = [1, 0], sizes = [63, 128], strides = [1, 1]} : vector<64x128xf32> to vector<63x128xf32>
    %115 = tpu.concatenate %114, %111 in 0 : vector<63x128xf32>, vector<1x128xf32> -> vector<64x128xf32>
    %cst_55 = arith.constant 0.000000e+00 : f32
    %116 = vector.broadcast %cst_55 : f32 to vector<64x128xf32>
    %117 = arith.select %19, %116, %113 : vector<64x128xi1>, vector<64x128xf32>
    %cst_56 = arith.constant 0.000000e+00 : f32
    %118 = vector.broadcast %cst_56 : f32 to vector<64x128xf32>
    %119 = arith.select %37, %118, %115 : vector<64x128xi1>, vector<64x128xf32>
    %120 = tpu.concatenate %117, %110, %119 in 1 : vector<64x128xf32>, vector<64x128xf32>, vector<64x128xf32> -> vector<64x384xf32>
    %121 = arith.truncf %120 : vector<64x384xf32> to vector<64x384xbf16>
    %c2 = arith.constant 2 : index
    %c0_57 = arith.constant 0 : index
    %c0_58 = arith.constant 0 : index
    %122 = vector.load %arg6[%c2, %c0_57, %c0_58] : memref<4x384x128xbf16, #tpu.memory_space<vmem>>, vector<1x384x128xbf16>
    %123 = vector.shape_cast %122 : vector<1x384x128xbf16> to vector<384x128xbf16>
    %cst_59 = arith.constant dense<0.000000e+00> : vector<64x128xf32>
    %124 = tpu.matmul %121, %123, %cst_59 {dimension_numbers = #tpu.dot_dimension_numbers<[1], [0], [0], [1], [0, 0, 1, 1], [], []>} : vector<64x384xbf16>, vector<384x128xbf16>, vector<64x128xf32> -> vector<64x128xf32>
    %c2_60 = arith.constant 2 : index
    %c0_61 = arith.constant 0 : index
    %c0_62 = arith.constant 0 : index
    %125 = vector.load %arg7[%c2_60, %c0_61, %c0_62] : memref<4x1x128xf32, #tpu.memory_space<vmem>>, vector<1x1x128xf32>
    %126 = vector.shape_cast %125 : vector<1x1x128xf32> to vector<1x128xf32>
    %127 = vector.broadcast %126 : vector<1x128xf32> to vector<64x128xf32>
    %128 = arith.addf %124, %127 : vector<64x128xf32>
    %cst_63 = arith.constant 0.000000e+00 : f32
    %129 = vector.broadcast %cst_63 : f32 to vector<64x128xf32>
    %130 = arith.maximumf %128, %129 : vector<64x128xf32>
    %cst_64 = arith.constant 0.000000e+00 : f32
    %131 = vector.broadcast %cst_64 : f32 to vector<1x128xf32>
    %132 = vector.extract_strided_slice %130 {offsets = [0, 0], sizes = [63, 128], strides = [1, 1]} : vector<64x128xf32> to vector<63x128xf32>
    %133 = tpu.concatenate %131, %132 in 0 : vector<1x128xf32>, vector<63x128xf32> -> vector<64x128xf32>
    %134 = vector.extract_strided_slice %130 {offsets = [1, 0], sizes = [63, 128], strides = [1, 1]} : vector<64x128xf32> to vector<63x128xf32>
    %135 = tpu.concatenate %134, %131 in 0 : vector<63x128xf32>, vector<1x128xf32> -> vector<64x128xf32>
    %cst_65 = arith.constant 0.000000e+00 : f32
    %136 = vector.broadcast %cst_65 : f32 to vector<64x128xf32>
    %137 = arith.select %19, %136, %133 : vector<64x128xi1>, vector<64x128xf32>
    %cst_66 = arith.constant 0.000000e+00 : f32
    %138 = vector.broadcast %cst_66 : f32 to vector<64x128xf32>
    %139 = arith.select %37, %138, %135 : vector<64x128xi1>, vector<64x128xf32>
    %140 = tpu.concatenate %137, %130, %139 in 1 : vector<64x128xf32>, vector<64x128xf32>, vector<64x128xf32> -> vector<64x384xf32>
    %141 = arith.truncf %140 : vector<64x384xf32> to vector<64x384xbf16>
    %c3 = arith.constant 3 : index
    %c0_67 = arith.constant 0 : index
    %c0_68 = arith.constant 0 : index
    %142 = vector.load %arg6[%c3, %c0_67, %c0_68] : memref<4x384x128xbf16, #tpu.memory_space<vmem>>, vector<1x384x128xbf16>
    %143 = vector.shape_cast %142 : vector<1x384x128xbf16> to vector<384x128xbf16>
    %cst_69 = arith.constant dense<0.000000e+00> : vector<64x128xf32>
    %144 = tpu.matmul %141, %143, %cst_69 {dimension_numbers = #tpu.dot_dimension_numbers<[1], [0], [0], [1], [0, 0, 1, 1], [], []>} : vector<64x384xbf16>, vector<384x128xbf16>, vector<64x128xf32> -> vector<64x128xf32>
    %c3_70 = arith.constant 3 : index
    %c0_71 = arith.constant 0 : index
    %c0_72 = arith.constant 0 : index
    %145 = vector.load %arg7[%c3_70, %c0_71, %c0_72] : memref<4x1x128xf32, #tpu.memory_space<vmem>>, vector<1x1x128xf32>
    %146 = vector.shape_cast %145 : vector<1x1x128xf32> to vector<1x128xf32>
    %147 = vector.broadcast %146 : vector<1x128xf32> to vector<64x128xf32>
    %148 = arith.addf %144, %147 : vector<64x128xf32>
    %149 = arith.addf %148, %52 : vector<64x128xf32>
    %150 = vector.shape_cast %149 : vector<64x128xf32> to vector<4x16x128xf32>
    %c0_73 = arith.constant 0 : index
    %c1_74 = arith.constant 1 : index
    %c0_75 = arith.constant 0 : index
    %c0_76 = arith.constant 0 : index
    %151 = vector.load %arg8[%c0_73, %c1_74, %c0_75, %c0_76] : memref<4x4x16x128xf32, #tpu.memory_space<vmem>>, vector<4x1x16x128xf32>
    %152 = vector.shape_cast %151 : vector<4x1x16x128xf32> to vector<4x16x128xf32>
    %153 = vector.shape_cast %150 : vector<4x16x128xf32> to vector<4x1x16x128xf32>
    tpu.vector_store %arg8[%c0_73, %c1_74, %c0_75, %c0_76], %153 {strides = array<i32>} : memref<4x4x16x128xf32, #tpu.memory_space<vmem>>, vector<4x1x16x128xf32>,
    %cst_77 = arith.constant 0.000000e+00 : f32
    %154 = vector.broadcast %cst_77 : f32 to vector<1x128xf32>
    %155 = vector.extract_strided_slice %63 {offsets = [0, 0], sizes = [63, 128], strides = [1, 1]} : vector<64x128xf32> to vector<63x128xf32>
    %156 = tpu.concatenate %154, %155 in 0 : vector<1x128xf32>, vector<63x128xf32> -> vector<64x128xf32>
    %157 = vector.extract_strided_slice %63 {offsets = [1, 0], sizes = [63, 128], strides = [1, 1]} : vector<64x128xf32> to vector<63x128xf32>
    %158 = tpu.concatenate %157, %154 in 0 : vector<63x128xf32>, vector<1x128xf32> -> vector<64x128xf32>
    %cst_78 = arith.constant 0.000000e+00 : f32
    %159 = vector.broadcast %cst_78 : f32 to vector<64x128xf32>
    %160 = arith.select %19, %159, %156 : vector<64x128xi1>, vector<64x128xf32>
    %cst_79 = arith.constant 0.000000e+00 : f32
    %161 = vector.broadcast %cst_79 : f32 to vector<64x128xf32>
    %162 = arith.select %37, %161, %158 : vector<64x128xi1>, vector<64x128xf32>
    %163 = arith.addf %160, %63 : vector<64x128xf32>
    %164 = arith.addf %163, %162 : vector<64x128xf32>
    %cst_80 = arith.constant 0.000000e+00 : f32
    %165 = vector.broadcast %cst_80 : f32 to vector<64x8xf32>
    %166 = vector.extract_strided_slice %164 {offsets = [0, 0], sizes = [64, 120], strides = [1, 1]} : vector<64x128xf32> to vector<64x120xf32>
    %167 = tpu.concatenate %165, %166 in 1 : vector<64x8xf32>, vector<64x120xf32> -> vector<64x128xf32>
    %168 = vector.extract_strided_slice %164 {offsets = [0, 8], sizes = [64, 120], strides = [1, 1]} : vector<64x128xf32> to vector<64x120xf32>
    %169 = tpu.concatenate %168, %165 in 1 : vector<64x120xf32>, vector<64x8xf32> -> vector<64x128xf32>
    %170 = arith.addf %167, %164 : vector<64x128xf32>
    %171 = arith.addf %170, %169 : vector<64x128xf32>
    %172 = arith.ori %19, %37 : vector<64x128xi1>
    %cst_81 = arith.constant 5.000000e-01 : f32
    %cst_82 = arith.constant 0.333333343 : f32
    %173 = vector.broadcast %cst_81 : f32 to vector<64x128xf32>
    %174 = vector.broadcast %cst_82 : f32 to vector<64x128xf32>
    %175 = arith.select %172, %173, %174 : vector<64x128xi1>, vector<64x128xf32>
    %176 = arith.ori %39, %41 : vector<64x128xi1>
    %cst_83 = arith.constant 5.000000e-01 : f32
    %cst_84 = arith.constant 0.333333343 : f32
    %177 = vector.broadcast %cst_83 : f32 to vector<64x128xf32>
    %178 = vector.broadcast %cst_84 : f32 to vector<64x128xf32>
    %179 = arith.select %176, %177, %178 : vector<64x128xi1>, vector<64x128xf32>
    %180 = arith.mulf %175, %179 : vector<64x128xf32>
    %181 = arith.mulf %171, %180 : vector<64x128xf32>
    %182 = arith.addf %181, %52 : vector<64x128xf32>
    %183 = vector.shape_cast %182 : vector<64x128xf32> to vector<4x16x128xf32>
    %c0_85 = arith.constant 0 : index
    %c2_86 = arith.constant 2 : index
    %c0_87 = arith.constant 0 : index
    %c0_88 = arith.constant 0 : index
    %184 = vector.load %arg8[%c0_85, %c2_86, %c0_87, %c0_88] : memref<4x4x16x128xf32, #tpu.memory_space<vmem>>, vector<4x1x16x128xf32>
    %185 = vector.shape_cast %184 : vector<4x1x16x128xf32> to vector<4x16x128xf32>
    %186 = vector.shape_cast %183 : vector<4x16x128xf32> to vector<4x1x16x128xf32>
    tpu.vector_store %arg8[%c0_85, %c2_86, %c0_87, %c0_88], %186 {strides = array<i32>} : memref<4x4x16x128xf32, #tpu.memory_space<vmem>>, vector<4x1x16x128xf32>,
    %cst_89 = arith.constant 0xFF800000 : f32
    %187 = vector.broadcast %cst_89 : f32 to vector<1x128xf32>
    %188 = vector.extract_strided_slice %52 {offsets = [0, 0], sizes = [63, 128], strides = [1, 1]} : vector<64x128xf32> to vector<63x128xf32>
    %189 = tpu.concatenate %187, %188 in 0 : vector<1x128xf32>, vector<63x128xf32> -> vector<64x128xf32>
    %190 = vector.extract_strided_slice %52 {offsets = [1, 0], sizes = [63, 128], strides = [1, 1]} : vector<64x128xf32> to vector<63x128xf32>
    %191 = tpu.concatenate %190, %187 in 0 : vector<63x128xf32>, vector<1x128xf32> -> vector<64x128xf32>
    %cst_90 = arith.constant 0xFF800000 : f32
    %192 = vector.broadcast %cst_90 : f32 to vector<64x128xf32>
    %193 = arith.select %19, %192, %189 : vector<64x128xi1>, vector<64x128xf32>
    %cst_91 = arith.constant 0xFF800000 : f32
    %194 = vector.broadcast %cst_91 : f32 to vector<64x128xf32>
    %195 = arith.select %37, %194, %191 : vector<64x128xi1>, vector<64x128xf32>
    %196 = arith.maximumf %193, %52 : vector<64x128xf32>
    %197 = arith.maximumf %196, %195 : vector<64x128xf32>
    %cst_92 = arith.constant 0xFF800000 : f32
    %198 = vector.broadcast %cst_92 : f32 to vector<64x8xf32>
    %199 = vector.extract_strided_slice %197 {offsets = [0, 0], sizes = [64, 120], strides = [1, 1]} : vector<64x128xf32> to vector<64x120xf32>
    %200 = tpu.concatenate %198, %199 in 1 : vector<64x8xf32>, vector<64x120xf32> -> vector<64x128xf32>
    %201 = vector.extract_strided_slice %197 {offsets = [0, 8], sizes = [64, 120], strides = [1, 1]} : vector<64x128xf32> to vector<64x120xf32>
    %202 = tpu.concatenate %201, %198 in 1 : vector<64x120xf32>, vector<64x8xf32> -> vector<64x128xf32>
    %203 = arith.maximumf %200, %197 : vector<64x128xf32>
    %204 = arith.maximumf %203, %202 : vector<64x128xf32>
    %c0_93 = arith.constant 0 : index
    %c0_94 = arith.constant 0 : index
    %c0_95 = arith.constant 0 : index
    %c0_96 = arith.constant 0 : index
    %205 = vector.load %arg8[%c0_93, %c0_94, %c0_95, %c0_96] : memref<4x4x16x128xf32, #tpu.memory_space<vmem>>, vector<4x1x16x128xf32>
    %206 = vector.shape_cast %205 : vector<4x1x16x128xf32> to vector<4x16x128xf32>
    %207 = vector.shape_cast %206 : vector<4x16x128xf32> to vector<64x128xf32>
    %208 = arith.addf %204, %207 : vector<64x128xf32>
    %209 = vector.shape_cast %208 : vector<64x128xf32> to vector<4x16x128xf32>
    %c0_97 = arith.constant 0 : index
    %c3_98 = arith.constant 3 : index
    %c0_99 = arith.constant 0 : index
    %c0_100 = arith.constant 0 : index
    %210 = vector.load %arg8[%c0_97, %c3_98, %c0_99, %c0_100] : memref<4x4x16x128xf32, #tpu.memory_space<vmem>>, vector<4x1x16x128xf32>
    %211 = vector.shape_cast %210 : vector<4x1x16x128xf32> to vector<4x16x128xf32>
    %212 = vector.shape_cast %209 : vector<4x16x128xf32> to vector<4x1x16x128xf32>
    tpu.vector_store %arg8[%c0_97, %c3_98, %c0_99, %c0_100], %212 {strides = array<i32>} : memref<4x4x16x128xf32, #tpu.memory_space<vmem>>, vector<4x1x16x128xf32>,
    return
  }
  func.func @transform_0(%arg0: i32) -> (i32, i32, i32) {
    %c0_i32 = arith.constant 0 : i32
    %c0_i32_0 = arith.constant 0 : i32
    %c0_i32_1 = arith.constant 0 : i32
    return %arg0, %c0_i32, %c0_i32_0 : i32, i32, i32
  }
  func.func @transform_1(%arg0: i32) -> (i32, i32, i32) {
    %c0_i32 = arith.constant 0 : i32
    %c0_i32_0 = arith.constant 0 : i32
    %c0_i32_1 = arith.constant 0 : i32
    return %arg0, %c0_i32, %c0_i32_0 : i32, i32, i32
  }
  func.func @transform_2(%arg0: i32) -> (i32, i32) {
    %c0_i32 = arith.constant 0 : i32
    %c0_i32_0 = arith.constant 0 : i32
    %c0_i32_1 = arith.constant 0 : i32
    return %c0_i32, %c0_i32_0 : i32, i32
  }
  func.func @transform_3(%arg0: i32) -> (i32, i32) {
    %c0_i32 = arith.constant 0 : i32
    %c0_i32_0 = arith.constant 0 : i32
    %c0_i32_1 = arith.constant 0 : i32
    return %c0_i32, %c0_i32_0 : i32, i32
  }
  func.func @transform_4(%arg0: i32) -> (i32, i32, i32) {
    %c0_i32 = arith.constant 0 : i32
    %c0_i32_0 = arith.constant 0 : i32
    %c0_i32_1 = arith.constant 0 : i32
    %c0_i32_2 = arith.constant 0 : i32
    return %c0_i32, %c0_i32_0, %c0_i32_1 : i32, i32, i32
  }
  func.func @transform_5(%arg0: i32) -> (i32, i32, i32) {
    %c0_i32 = arith.constant 0 : i32
    %c0_i32_0 = arith.constant 0 : i32
    %c0_i32_1 = arith.constant 0 : i32
    %c0_i32_2 = arith.constant 0 : i32
    return %c0_i32, %c0_i32_0, %c0_i32_1 : i32, i32, i32
  }
  func.func @transform_6(%arg0: i32) -> (i32, i32, i32) {
    %c0_i32 = arith.constant 0 : i32
    %c0_i32_0 = arith.constant 0 : i32
    %c0_i32_1 = arith.constant 0 : i32
    %c0_i32_2 = arith.constant 0 : i32
    return %c0_i32, %c0_i32_0, %c0_i32_1 : i32, i32, i32
  }
  func.func @transform_7(%arg0: i32) -> (i32, i32, i32, i32) {
    %c0_i32 = arith.constant 0 : i32
    %c0_i32_0 = arith.constant 0 : i32
    %c0_i32_1 = arith.constant 0 : i32
    %c0_i32_2 = arith.constant 0 : i32
    return %arg0, %c0_i32, %c0_i32_0, %c0_i32_1 : i32, i32, i32, i32
  }
}

</mosaic_0001>

<llo_original>
// kernel: tpu_custom_call.1
$region0: #{tpu_custom_call.1}
  #allocation0 [shape = 'u32[]', space=smem, size = 0x4, offset = 0x4, fixed_abs, tag = 'smem constant byte address 0x4 - core index']
  #allocation1 [shape = 'u32[72,128]{1,0:T(1,128)}', space=vmem, size = 0x9000, scoped, tag = 'internal scratch']
  %s0 = inlined_call_operand.hbm [shape: f32[8,16,128], index: 0, kind: input, shape index: {}]
  %s1 = inlined_call_operand.hbm [shape: f32[8,16,128], index: 1, kind: input, shape index: {}]
  %s2 = inlined_call_operand.hbm [shape: bf16[128,128], index: 2, kind: input, shape index: {}]
  %s3 = inlined_call_operand.hbm [shape: bf16[128,128], index: 3, kind: input, shape index: {}]
  %s4 = inlined_call_operand.hbm [shape: f32[2,1,128], index: 4, kind: input, shape index: {}]
  %s5 = inlined_call_operand.hbm [shape: bf16[4,384,128], index: 5, kind: input, shape index: {}]
  %s6 = inlined_call_operand.vmem [shape: f32[4,1,128], index: 6, kind: input, shape index: {}]
  %s7 = inlined_call_operand.hbm [shape: f32[8,4,16,128], index: 7, kind: output, shape index: {}]
  %s8 = sld [smem:[#allocation0]]
  $region85: #{tpu_custom_call.1} parent=0
    _
  %s10 = ssub.s32 1, %s8
  %s11 = scalar_select 0, %s10, %s8
  $region1: #{tpu_custom_call.1} parent=0
    #allocation2 [shape = 'u8[65536]{0}', space=vmem, size = 0x10000, scoped, tag = 'input window, operand 0']
    #allocation3 [shape = 's32[2]{0}', space=sflag, size = 0x8, scoped, tag = 'scoped memory for tpu_custom_call.1']
    #allocation4 [shape = 's32[2]{0}', space=sflag, size = 0x8, scoped, tag = 'scoped memory for tpu_custom_call.1']
    #allocation5 [shape = 'u8[65536]{0}', space=vmem, size = 0x10000, scoped, tag = 'input window, operand 1']
    #allocation6 [shape = 's32[2]{0}', space=sflag, size = 0x8, scoped, tag = 'scoped memory for tpu_custom_call.1']
    #allocation7 [shape = 'u8[32768]{0}', space=vmem, size = 0x8000, scoped, tag = 'input window, operand 2, single buffered']
    #allocation8 [shape = 'u8[32768]{0}', space=vmem, size = 0x8000, scoped, tag = 'input window, operand 3, single buffered']
    #allocation9 [shape = 's32[1]{0}', space=sflag, size = 0x4, scoped, tag = 'scoped memory for tpu_custom_call.1']
    #allocation10 [shape = 'u8[1024]{0}', space=vmem, size = 0x400, scoped, tag = 'input window, operand 4, single buffered']
    #allocation11 [shape = 'u8[393216]{0}', space=vmem, size = 0x60000, scoped, tag = 'input window, operand 5, single buffered']
    #allocation12 [shape = 's32[1]{0}', space=sflag, size = 0x4, scoped, tag = 'scoped memory for tpu_custom_call.1']
    #allocation13 [shape = 'u8[262144]{0}', space=vmem, size = 0x40000, scoped, tag = 'output window, operand 0']
    %12 = vsyncpa [#allocation3], 0
    %s13 = scalar_lea.sflag [#allocation3], 1
    %14 = vsyncpa %s13, 0
    %15 = vsyncpa [#allocation6], 0
    %s16 = scalar_lea.sflag [#allocation6], 1
    %17 = vsyncpa %s16, 0
    %18 = vsyncpa [#allocation9], 0
    %19 = vsyncpa [#allocation12], 0
    %20 = vsyncpa [#allocation4], 0
    %s21 = scalar_lea.sflag [#allocation4], 1
    %22 = vsyncpa %s21, 0
    loop: start=0, step=1, limit=4
    $region2: #{tpu_custom_call.1} parent=1 // loop_pre_header
      _
    $region3: #{tpu_custom_call.1} parent=1 // loop_header
      %s24 = sphi 0, %s28
      %p25 = scmp.ge.s32.totalorder %s24, 4
      %s34 = sphi 0, %s36
      %s37 = sphi 0, %s34
      %s38 = sphi 0, %s37
      %s54 = sphi 0, %s38
      %s60 = sphi 0, %s62
      %s63 = sphi 0, %s60
      %s64 = sphi 0, %s63
      %s80 = sphi 0, %s64
      %s84 = sphi 0, %s84
      %s86 = sphi 0, %s84
      %s87 = sphi 0, %s86
      %s101 = sphi 0, %s87
      %s105 = sphi 0, %s105
      %s107 = sphi 0, %s105
      %s108 = sphi 0, %s107
      %s122 = sphi 0, %s108
      %s126 = sphi 0, %s126
      %s128 = sphi 0, %s126
      %s129 = sphi 0, %s128
      %s143 = sphi 0, %s129
      %s147 = sphi 0, %s147
      %s149 = sphi 0, %s147
      %s150 = sphi 0, %s149
      %s164 = sphi 0, %s150
      %s168 = sphi 0, %s168
      %s170 = sphi 0, %s168
      %s171 = sphi 0, %s170
      %s185 = sphi 0, %s171
      %s191 = sphi 0, %s193
      %s194 = sphi 0, %s191
      %s195 = sphi 0, %s194
      %s211 = sphi 0, %s195
    $region4: #{tpu_custom_call.1} parent=1 // loop_header_branch
      %27 = sbr.rel (%p25) target = $region8
    $region5: #{tpu_custom_call.1} parent=1 // loop_body
      %s29 = ssub.s32 %s24, 1
      %s30 = ssub.s32 %s24, 2
      %s31 = sadd.s32 %s24, 1
      %s32 = ssub.s32 %s24, %s31
      %p33 = scmp.eq.s32.totalorder %s32, 0
      %s35 = sadd.s32 %s34, 1
      %s36 = scalar_select %p33, %s34, %s35
      %p39 = pneg %p33
      %p40 = scmp.eq.s32.totalorder %s24, 1
      %p41 = por %p39, %p40
      %p42 = scmp.ne.s32.totalorder %s34, %s37
      %p43 = scmp.eq.s32.totalorder %s24, 0
      %p44 = por %p42, %p43
      %p45 = scmp.ne.s32.totalorder %s34, %s37
      %p46 = scmp.eq.s32.totalorder %s29, 1
      %p47 = por %p45, %p46
      %p48 = scmp.ne.s32.totalorder %s37, %s38
      %p49 = scmp.eq.s32.totalorder %s29, 0
      %p50 = por %p48, %p49
      %p51 = scmp.ne.s32.totalorder %s37, %s38
      %p52 = scmp.eq.s32.totalorder %s30, 1
      %p53 = por %p51, %p52
      %p55 = scmp.ne.s32.totalorder %s38, %s54
      %p56 = scmp.eq.s32.totalorder %s30, 0
      %p57 = por %p55, %p56
      %s58 = ssub.s32 %s24, %s31
      %p59 = scmp.eq.s32.totalorder %s58, 0
      %s61 = sadd.s32 %s60, 1
      %s62 = scalar_select %p59, %s60, %s61
      %p65 = pneg %p59
      %p66 = scmp.eq.s32.totalorder %s24, 1
      %p67 = por %p65, %p66
      %p68 = scmp.ne.s32.totalorder %s60, %s63
      %p69 = scmp.eq.s32.totalorder %s24, 0
      %p70 = por %p68, %p69
      %p71 = scmp.ne.s32.totalorder %s60, %s63
      %p72 = scmp.eq.s32.totalorder %s29, 1
      %p73 = por %p71, %p72
      %p74 = scmp.ne.s32.totalorder %s63, %s64
      %p75 = scmp.eq.s32.totalorder %s29, 0
      %p76 = por %p74, %p75
      %p77 = scmp.ne.s32.totalorder %s63, %s64
      %p78 = scmp.eq.s32.totalorder %s30, 1
      %p79 = por %p77, %p78
      %p81 = scmp.ne.s32.totalorder %s64, %s80
      %p82 = scmp.eq.s32.totalorder %s30, 0
      %p83 = por %p81, %p82
      %s85 = sadd.s32 %s84, 1
      %p88 = scmp.eq.s32.totalorder %s24, 1
      %p89 = scmp.ne.s32.totalorder %s84, %s86
      %p90 = scmp.eq.s32.totalorder %s24, 0
      %p91 = por %p89, %p90
      %p92 = scmp.ne.s32.totalorder %s84, %s86
      %p93 = scmp.eq.s32.totalorder %s29, 1
      %p94 = por %p92, %p93
      %p95 = scmp.ne.s32.totalorder %s86, %s87
      %p96 = scmp.eq.s32.totalorder %s29, 0
      %p97 = por %p95, %p96
      %p98 = scmp.ne.s32.totalorder %s86, %s87
      %p99 = scmp.eq.s32.totalorder %s30, 1
      %p100 = por %p98, %p99
      %p102 = scmp.ne.s32.totalorder %s87, %s101
      %p103 = scmp.eq.s32.totalorder %s30, 0
      %p104 = por %p102, %p103
      %s106 = sadd.s32 %s105, 1
      %p109 = scmp.eq.s32.totalorder %s24, 1
      %p110 = scmp.ne.s32.totalorder %s105, %s107
      %p111 = scmp.eq.s32.totalorder %s24, 0
      %p112 = por %p110, %p111
      %p113 = scmp.ne.s32.totalorder %s105, %s107
      %p114 = scmp.eq.s32.totalorder %s29, 1
      %p115 = por %p113, %p114
      %p116 = scmp.ne.s32.totalorder %s107, %s108
      %p117 = scmp.eq.s32.totalorder %s29, 0
      %p118 = por %p116, %p117
      %p119 = scmp.ne.s32.totalorder %s107, %s108
      %p120 = scmp.eq.s32.totalorder %s30, 1
      %p121 = por %p119, %p120
      %p123 = scmp.ne.s32.totalorder %s108, %s122
      %p124 = scmp.eq.s32.totalorder %s30, 0
      %p125 = por %p123, %p124
      %s127 = sadd.s32 %s126, 1
      %p130 = scmp.eq.s32.totalorder %s24, 1
      %p131 = scmp.ne.s32.totalorder %s126, %s128
      %p132 = scmp.eq.s32.totalorder %s24, 0
      %p133 = por %p131, %p132
      %p134 = scmp.ne.s32.totalorder %s126, %s128
      %p135 = scmp.eq.s32.totalorder %s29, 1
      %p136 = por %p134, %p135
      %p137 = scmp.ne.s32.totalorder %s128, %s129
      %p138 = scmp.eq.s32.totalorder %s29, 0
      %p139 = por %p137, %p138
      %p140 = scmp.ne.s32.totalorder %s128, %s129
      %p141 = scmp.eq.s32.totalorder %s30, 1
      %p142 = por %p140, %p141
      %p144 = scmp.ne.s32.totalorder %s129, %s143
      %p145 = scmp.eq.s32.totalorder %s30, 0
      %p146 = por %p144, %p145
      %s148 = sadd.s32 %s147, 1
      %p151 = scmp.eq.s32.totalorder %s24, 1
      %p152 = scmp.ne.s32.totalorder %s147, %s149
      %p153 = scmp.eq.s32.totalorder %s24, 0
      %p154 = por %p152, %p153
      %p155 = scmp.ne.s32.totalorder %s147, %s149
      %p156 = scmp.eq.s32.totalorder %s29, 1
      %p157 = por %p155, %p156
      %p158 = scmp.ne.s32.totalorder %s149, %s150
      %p159 = scmp.eq.s32.totalorder %s29, 0
      %p160 = por %p158, %p159
      %p161 = scmp.ne.s32.totalorder %s149, %s150
      %p162 = scmp.eq.s32.totalorder %s30, 1
      %p163 = por %p161, %p162
      %p165 = scmp.ne.s32.totalorder %s150, %s164
      %p166 = scmp.eq.s32.totalorder %s30, 0
      %p167 = por %p165, %p166
      %s169 = sadd.s32 %s168, 1
      %p172 = scmp.eq.s32.totalorder %s24, 1
      %p173 = scmp.ne.s32.totalorder %s168, %s170
      %p174 = scmp.eq.s32.totalorder %s24, 0
      %p175 = por %p173, %p174
      %p176 = scmp.ne.s32.totalorder %s168, %s170
      %p177 = scmp.eq.s32.totalorder %s29, 1
      %p178 = por %p176, %p177
      %p179 = scmp.ne.s32.totalorder %s170, %s171
      %p180 = scmp.eq.s32.totalorder %s29, 0
      %p181 = por %p179, %p180
      %p182 = scmp.ne.s32.totalorder %s170, %s171
      %p183 = scmp.eq.s32.totalorder %s30, 1
      %p184 = por %p182, %p183
      %p186 = scmp.ne.s32.totalorder %s171, %s185
      %p187 = scmp.eq.s32.totalorder %s30, 0
      %p188 = por %p186, %p187
      %s189 = ssub.s32 %s24, %s31
      %p190 = scmp.eq.s32.totalorder %s189, 0
      %s192 = sadd.s32 %s191, 1
      %s193 = scalar_select %p190, %s191, %s192
      %p196 = pneg %p190
      %p197 = scmp.eq.s32.totalorder %s24, 1
      %p198 = por %p196, %p197
      %p199 = scmp.ne.s32.totalorder %s191, %s194
      %p200 = scmp.eq.s32.totalorder %s24, 0
      %p201 = por %p199, %p200
      %p202 = scmp.ne.s32.totalorder %s191, %s194
      %p203 = scmp.eq.s32.totalorder %s29, 1
      %p204 = por %p202, %p203
      %p205 = scmp.ne.s32.totalorder %s194, %s195
      %p206 = scmp.eq.s32.totalorder %s29, 0
      %p207 = por %p205, %p206
      %p208 = scmp.ne.s32.totalorder %s194, %s195
      %p209 = scmp.eq.s32.totalorder %s30, 1
      %p210 = por %p208, %p209
      %p212 = scmp.ne.s32.totalorder %s195, %s211
      %p213 = scmp.eq.s32.totalorder %s30, 0
      %p214 = por %p212, %p213
      %p215 = scmp.le.s32.totalorder 1, %s24
      %p216 = scmp.lt.s32.totalorder %s24, 3
      %p217 = pnand %p215, %p216
      %p218 = pneg %p217
      // Predicated region
      $region9: #{tpu_custom_call.1} parent=5 // pred_check
        _
      $region10: #{tpu_custom_call.1} parent=5 // pred_check_branch
        %220 = sbr.rel (%p217) target = $region12
      $region11: #{tpu_custom_call.1} parent=5 // pred_region
        %s221 = ssub.s32 %s24, 1
        // Predicated region
        $region13: #{tpu_custom_call.1} parent=11 // pred_check
          %p222 = pneg %p97
        $region14: #{tpu_custom_call.1} parent=11 // pred_check_branch
          %224 = sbr.rel (%p222) target = $region16
        $region15: #{tpu_custom_call.1} parent=11 // pred_region
          %226 = vsyncadd [#allocation6], 0
          %s227 = sshll.u32 %s2, 4
          %s228 = int_to_ptr.hbm [resolvable:$true] %s227
          %s229 = sshll.u32 [#allocation7], 4
          %s230 = int_to_ptr.vmem [resolvable:$true] %s229
          %235 = dma.hbm_to_vmem [thread:$0]  %s228, 1024, %s230, [#allocation6], 64, 64, 4
        $region16: #{tpu_custom_call.1} parent=11 // pred_fallthru
          _
        // Predicated region
        $region17: #{tpu_custom_call.1} parent=11 // pred_check
          %p236 = pneg %p118
        $region18: #{tpu_custom_call.1} parent=11 // pred_check_branch
          %238 = sbr.rel (%p236) target = $region20
        $region19: #{tpu_custom_call.1} parent=11 // pred_region
          %240 = vsyncadd [#allocation9], 0
          %s241 = sshll.u32 %s3, 4
          %s242 = int_to_ptr.hbm [resolvable:$true] %s241
          %s243 = sshll.u32 [#allocation8], 4
          %s244 = int_to_ptr.vmem [resolvable:$true] %s243
          %249 = dma.hbm_to_vmem [thread:$0]  %s242, 1024, %s244, [#allocation9], 64, 64, 4
        $region20: #{tpu_custom_call.1} parent=11 // pred_fallthru
          _
        // Predicated region
        $region21: #{tpu_custom_call.1} parent=11 // pred_check
          %p250 = pneg %p139
        $region22: #{tpu_custom_call.1} parent=11 // pred_check_branch
          %252 = sbr.rel (%p250) target = $region24
        $region23: #{tpu_custom_call.1} parent=11 // pred_region
          %254 = vsyncadd [#allocation9], 0
          %s255 = sshll.u32 %s4, 4
          %s256 = int_to_ptr.hbm [resolvable:$true] %s255
          %s257 = sshll.u32 [#allocation10], 4
          %s258 = int_to_ptr.vmem [resolvable:$true] %s257
          %263 = dma.hbm_to_vmem [thread:$0]  %s256, 32, %s258, [#allocation9], 16, 16, 1
        $region24: #{tpu_custom_call.1} parent=11 // pred_fallthru
          _
        // Predicated region
        $region25: #{tpu_custom_call.1} parent=11 // pred_check
          %p264 = pneg %p160
        $region26: #{tpu_custom_call.1} parent=11 // pred_check_branch
          %266 = sbr.rel (%p264) target = $region28
        $region27: #{tpu_custom_call.1} parent=11 // pred_region
          %268 = vsyncadd [#allocation12], 0
          %s269 = sshll.u32 %s5, 4
          %s270 = int_to_ptr.hbm [resolvable:$true] %s269
          %s271 = sshll.u32 [#allocation11], 4
          %s272 = int_to_ptr.vmem [resolvable:$true] %s271
          %277 = dma.hbm_to_vmem [thread:$0]  %s270, 12288, %s272, [#allocation12], 64, 64, 4
        $region28: #{tpu_custom_call.1} parent=11 // pred_fallthru
          _
        // Predicated region
        $region29: #{tpu_custom_call.1} parent=11 // pred_check
          %p278 = pneg %p181
        $region30: #{tpu_custom_call.1} parent=11 // pred_check_branch
          %280 = sbr.rel (%p278) target = $region32
        $region31: #{tpu_custom_call.1} parent=11 // pred_region
          _
        $region32: #{tpu_custom_call.1} parent=11 // pred_fallthru
          _
      $region12: #{tpu_custom_call.1} parent=5 // pred_fallthru
        _
      %p281 = scmp.lt.s32.totalorder %s24, 2
      // Predicated region
      $region33: #{tpu_custom_call.1} parent=5 // pred_check
        %p282 = pneg %p281
      $region34: #{tpu_custom_call.1} parent=5 // pred_check_branch
        %284 = sbr.rel (%p282) target = $region36
      $region35: #{tpu_custom_call.1} parent=5 // pred_region
        // Predicated region
        $region37: #{tpu_custom_call.1} parent=35 // pred_check
          %p285 = pneg %p44
        $region38: #{tpu_custom_call.1} parent=35 // pred_check_branch
          %287 = sbr.rel (%p285) target = $region40
        $region39: #{tpu_custom_call.1} parent=35 // pred_region
          %s288 = sand.u32 %s34, 1
          %s289 = scalar_lea.sflag [#allocation3], %s288
          %s290 = sand.u32 %s34, 1
          %s291 = smul.addr %s290, 64
          %s292 = scalar_lea.vmem [#allocation2], %s291
          %s293 = smul.u32 4, %s24
          %295 = vsyncadd %s289, 0
          %s296 = smul.addr %s293, 2
          %s297 = smul.addr %s296, 8
          %s298 = scalar_lea.hbm %s0, %s297
          %s299 = sshll.u32 %s298, 4
          %s300 = int_to_ptr.hbm [resolvable:$true] %s299
          %s301 = sshll.u32 %s292, 4
          %s302 = int_to_ptr.vmem [resolvable:$true] %s301
          %307 = dma.hbm_to_vmem [thread:$0]  %s300, 1024, %s302, %s289, 128, 128, 8
        $region40: #{tpu_custom_call.1} parent=35 // pred_fallthru
          _
        // Predicated region
        $region41: #{tpu_custom_call.1} parent=35 // pred_check
          %p308 = pneg %p70
        $region42: #{tpu_custom_call.1} parent=35 // pred_check_branch
          %310 = sbr.rel (%p308) target = $region44
        $region43: #{tpu_custom_call.1} parent=35 // pred_region
          %s311 = sand.u32 %s24, 1
          %s312 = scalar_lea.sflag [#allocation6], %s311
          %s313 = sand.u32 %s60, 1
          %s314 = smul.addr %s313, 64
          %s315 = scalar_lea.vmem [#allocation5], %s314
          %s316 = smul.u32 4, %s24
          %318 = vsyncadd %s312, 0
          %s319 = smul.addr %s316, 2
          %s320 = smul.addr %s319, 8
          %s321 = scalar_lea.hbm %s1, %s320
          %s322 = sshll.u32 %s321, 4
          %s323 = int_to_ptr.hbm [resolvable:$true] %s322
          %s324 = sshll.u32 %s315, 4
          %s325 = int_to_ptr.vmem [resolvable:$true] %s324
          %330 = dma.hbm_to_vmem [thread:$0]  %s323, 1024, %s325, %s312, 128, 128, 8
        $region44: #{tpu_custom_call.1} parent=35 // pred_fallthru
          _
      $region36: #{tpu_custom_call.1} parent=5 // pred_fallthru
        _
      %p331 = scmp.le.s32.totalorder 1, %s24
      %p332 = scmp.lt.s32.totalorder %s24, 3
      %p333 = pnand %p331, %p332
      %p334 = pneg %p333
      // Predicated region
      $region45: #{tpu_custom_call.1} parent=5 // pred_check
        _
      $region46: #{tpu_custom_call.1} parent=5 // pred_check_branch
        %336 = sbr.rel (%p333) target = $region48
      $region47: #{tpu_custom_call.1} parent=5 // pred_region
        %s337 = ssub.s32 %s24, 1
        %s338 = sand.u32 %s37, 1
        %s339 = scalar_lea.sflag [#allocation3], %s338
        %s340 = sand.u32 %s37, 1
        %s341 = smul.addr %s340, 64
        %s342 = scalar_lea.vmem [#allocation2], %s341
        // Predicated region
        $region49: #{tpu_custom_call.1} parent=47 // pred_check
          %p343 = pneg %p50
        $region50: #{tpu_custom_call.1} parent=47 // pred_check_branch
          %345 = sbr.rel (%p343) target = $region52
        $region51: #{tpu_custom_call.1} parent=47 // pred_region
          %347 = dma.done %s339, 1024
        $region52: #{tpu_custom_call.1} parent=47 // pred_fallthru
          _
        %s348 = sand.u32 %s29, 1
        %s349 = scalar_lea.sflag [#allocation6], %s348
        %s350 = sand.u32 %s63, 1
        %s351 = smul.addr %s350, 64
        %s352 = scalar_lea.vmem [#allocation5], %s351
        // Predicated region
        $region53: #{tpu_custom_call.1} parent=47 // pred_check
          %p353 = pneg %p76
        $region54: #{tpu_custom_call.1} parent=47 // pred_check_branch
          %355 = sbr.rel (%p353) target = $region56
        $region55: #{tpu_custom_call.1} parent=47 // pred_region
          %357 = dma.done %s349, 1024
        $region56: #{tpu_custom_call.1} parent=47 // pred_fallthru
          _
        // Predicated region
        $region57: #{tpu_custom_call.1} parent=47 // pred_check
          %p358 = pneg %p97
        $region58: #{tpu_custom_call.1} parent=47 // pred_check_branch
          %360 = sbr.rel (%p358) target = $region60
        $region59: #{tpu_custom_call.1} parent=47 // pred_region
          %362 = dma.done [#allocation6], 1024
        $region60: #{tpu_custom_call.1} parent=47 // pred_fallthru
          _
        // Predicated region
        $region61: #{tpu_custom_call.1} parent=47 // pred_check
          %p363 = pneg %p118
        $region62: #{tpu_custom_call.1} parent=47 // pred_check_branch
          %365 = sbr.rel (%p363) target = $region64
        $region63: #{tpu_custom_call.1} parent=47 // pred_region
          %367 = dma.done [#allocation9], 1024
        $region64: #{tpu_custom_call.1} parent=47 // pred_fallthru
          _
        // Predicated region
        $region65: #{tpu_custom_call.1} parent=47 // pred_check
          %p368 = pneg %p139
        $region66: #{tpu_custom_call.1} parent=47 // pred_check_branch
          %370 = sbr.rel (%p368) target = $region68
        $region67: #{tpu_custom_call.1} parent=47 // pred_region
          %372 = dma.done [#allocation9], 32
        $region68: #{tpu_custom_call.1} parent=47 // pred_fallthru
          _
        // Predicated region
        $region69: #{tpu_custom_call.1} parent=47 // pred_check
          %p373 = pneg %p160
        $region70: #{tpu_custom_call.1} parent=47 // pred_check_branch
          %375 = sbr.rel (%p373) target = $region72
        $region71: #{tpu_custom_call.1} parent=47 // pred_region
          %377 = dma.done [#allocation12], 12288
        $region72: #{tpu_custom_call.1} parent=47 // pred_fallthru
          _
        %s378 = sand.u32 %s37, 1
        %s379 = scalar_lea.sflag [#allocation3], %s378
        %s380 = sand.u32 %s37, 1
        %s381 = smul.addr %s380, 64
        %s382 = scalar_lea.vmem [#allocation2], %s381
        %p383 = pneg %p50
        %p384 = pneg %p47
        %s385 = sand.u32 %s29, 1
        %s386 = scalar_lea.sflag [#allocation6], %s385
        %s387 = sand.u32 %s63, 1
        %s388 = smul.addr %s387, 64
        %s389 = scalar_lea.vmem [#allocation5], %s388
        %p390 = pneg %p76
        %p391 = pneg %p73
        %p392 = pneg %p97
        %p393 = pneg %p94
        %p394 = pneg %p118
        %p395 = pneg %p115
        %p396 = pneg %p139
        %p397 = pneg %p136
        %p398 = pneg %p160
        %p399 = pneg %p157
        %p400 = pneg %p181
        %p401 = pneg %p178
        %p402 = pneg %p207
        %p403 = pneg %p204
        %s404 = sand.u32 %s194, 1
        %s405 = scalar_lea.sflag [#allocation4], %s404
        %s406 = sand.u32 %s194, 1
        %s407 = smul.addr %s406, 256
        %s408 = scalar_lea.vmem [#allocation13], %s407
        %s409 = smul.u32 4, %s29
        %s410 = smul.u32 4, %s29
        %s411 = smul.u32 4, %s29
        %v412 = vlaneseq
        %v413 = vshrl.u32 %v412, 7
        %v414 = vadd.s32 %v413, 8
        %v415 = vadd.s32 %v413, 16
        %v416 = vadd.s32 %v413, 24
        %v417 = vadd.s32 %v413, 32
        %v418 = vadd.s32 %v413, 40
        %v419 = vadd.s32 %v413, 48
        %v420 = vadd.s32 %v413, 56
        %v421 = vlaneseq
        %v422 = vand.u32 %v421, 127
        %vm423 = vcmp.lt.s32.totalorder %v413, 0
        %v424 = vsub.s32 0, %v413
        %v425 = vsel %vm423, %v424, %v413
        %v426 = vshrl.u32 %v425, 4
        %v427 = vand.u32 %v425, 15
        %v428 = vsub.s32 0, %v427
        %v429 = vsel %vm423, %v428, %v427
        %vm430 = vcmp.lt.s32.totalorder %v414, 0
        %v431 = vsub.s32 0, %v414
        %v432 = vsel %vm430, %v431, %v414
        %v433 = vshrl.u32 %v432, 4
        %v434 = vand.u32 %v432, 15
        %v435 = vsub.s32 0, %v434
        %v436 = vsel %vm430, %v435, %v434
        %vm437 = vcmp.lt.s32.totalorder %v415, 0
        %v438 = vsub.s32 0, %v415
        %v439 = vsel %vm437, %v438, %v415
        %v440 = vshrl.u32 %v439, 4
        %v441 = vand.u32 %v439, 15
        %v442 = vsub.s32 0, %v441
        %v443 = vsel %vm437, %v442, %v441
        %vm444 = vcmp.lt.s32.totalorder %v416, 0
        %v445 = vsub.s32 0, %v416
        %v446 = vsel %vm444, %v445, %v416
        %v447 = vshrl.u32 %v446, 4
        %v448 = vand.u32 %v446, 15
        %v449 = vsub.s32 0, %v448
        %v450 = vsel %vm444, %v449, %v448
        %vm451 = vcmp.lt.s32.totalorder %v417, 0
        %v452 = vsub.s32 0, %v417
        %v453 = vsel %vm451, %v452, %v417
        %v454 = vshrl.u32 %v453, 4
        %v455 = vand.u32 %v453, 15
        %v456 = vsub.s32 0, %v455
        %v457 = vsel %vm451, %v456, %v455
        %vm458 = vcmp.lt.s32.totalorder %v418, 0
        %v459 = vsub.s32 0, %v418
        %v460 = vsel %vm458, %v459, %v418
        %v461 = vshrl.u32 %v460, 4
        %v462 = vand.u32 %v460, 15
        %v463 = vsub.s32 0, %v462
        %v464 = vsel %vm458, %v463, %v462
        %vm465 = vcmp.lt.s32.totalorder %v419, 0
        %v466 = vsub.s32 0, %v419
        %v467 = vsel %vm465, %v466, %v419
        %v468 = vshrl.u32 %v467, 4
        %v469 = vand.u32 %v467, 15
        %v470 = vsub.s32 0, %v469
        %v471 = vsel %vm465, %v470, %v469
        %vm472 = vcmp.lt.s32.totalorder %v420, 0
        %v473 = vsub.s32 0, %v420
        %v474 = vsel %vm472, %v473, %v420
        %v475 = vshrl.u32 %v474, 4
        %v476 = vand.u32 %v474, 15
        %v477 = vsub.s32 0, %v476
        %v478 = vsel %vm472, %v477, %v476
        %vm479 = vcmp.ne.s32.totalorder %v429, 0
        %vm480 = vcmp.ne.s32.totalorder %v436, 0
        %vm481 = vcmp.ne.s32.totalorder %v443, 0
        %vm482 = vcmp.ne.s32.totalorder %v450, 0
        %vm483 = vcmp.ne.s32.totalorder %v457, 0
        %vm484 = vcmp.ne.s32.totalorder %v464, 0
        %vm485 = vcmp.ne.s32.totalorder %v471, 0
        %vm486 = vcmp.ne.s32.totalorder %v478, 0
        %vm487 = vcmp.lt.s32.totalorder %v429, 0
        %vm488 = vcmp.lt.s32.totalorder %v436, 0
        %vm489 = vcmp.lt.s32.totalorder %v443, 0
        %vm490 = vcmp.lt.s32.totalorder %v450, 0
        %vm491 = vcmp.lt.s32.totalorder %v457, 0
        %vm492 = vcmp.lt.s32.totalorder %v464, 0
        %vm493 = vcmp.lt.s32.totalorder %v471, 0
        %vm494 = vcmp.lt.s32.totalorder %v478, 0
        %vm495 = vmand %vm487, %vm479
        %vm496 = vmand %vm488, %vm480
        %vm497 = vmand %vm489, %vm481
        %vm498 = vmand %vm490, %vm482
        %vm499 = vmand %vm491, %vm483
        %vm500 = vmand %vm492, %vm484
        %vm501 = vmand %vm493, %vm485
        %vm502 = vmand %vm494, %vm486
        %v503 = vadd.s32 %v429, 16
        %v504 = vadd.s32 %v436, 16
        %v505 = vadd.s32 %v443, 16
        %v506 = vadd.s32 %v450, 16
        %v507 = vadd.s32 %v457, 16
        %v508 = vadd.s32 %v464, 16
        %v509 = vadd.s32 %v471, 16
        %v510 = vadd.s32 %v478, 16
        %v511 = vsel %vm495, %v503, %v429
        %v512 = vsel %vm496, %v504, %v436
        %v513 = vsel %vm497, %v505, %v443
        %v514 = vsel %vm498, %v506, %v450
        %v515 = vsel %vm499, %v507, %v457
        %v516 = vsel %vm500, %v508, %v464
        %v517 = vsel %vm501, %v509, %v471
        %v518 = vsel %vm502, %v510, %v478
        %vm519 = vcmp.eq.s32.totalorder %v511, 0
        %vm520 = vcmp.eq.s32.totalorder %v512, 0
        %vm521 = vcmp.eq.s32.totalorder %v513, 0
        %vm522 = vcmp.eq.s32.totalorder %v514, 0
        %vm523 = vcmp.eq.s32.totalorder %v515, 0
        %vm524 = vcmp.eq.s32.totalorder %v516, 0
        %vm525 = vcmp.eq.s32.totalorder %v517, 0
        %vm526 = vcmp.eq.s32.totalorder %v518, 0
        %vm527 = vcmp.eq.s32.totalorder %v511, 15
        %vm528 = vcmp.eq.s32.totalorder %v512, 15
        %vm529 = vcmp.eq.s32.totalorder %v513, 15
        %vm530 = vcmp.eq.s32.totalorder %v514, 15
        %vm531 = vcmp.eq.s32.totalorder %v515, 15
        %vm532 = vcmp.eq.s32.totalorder %v516, 15
        %vm533 = vcmp.eq.s32.totalorder %v517, 15
        %vm534 = vcmp.eq.s32.totalorder %v518, 15
        %vm535 = vcmp.lt.s32.totalorder %v422, 8
        %vm536 = vcmp.ge.s32.totalorder %v422, 120
        %v537 = vld [vmem:[%s342] sm:$0xff]
        %v538 = vld [vmem:[%s342 + $0x8] sm:$0xff]
        %v539 = vld [vmem:[%s342 + $0x10] sm:$0xff]
        %v540 = vld [vmem:[%s342 + $0x18] sm:$0xff]
        %v541 = vld [vmem:[%s342 + $0x20] sm:$0xff]
        %v542 = vld [vmem:[%s342 + $0x28] sm:$0xff]
        %v543 = vld [vmem:[%s342 + $0x30] sm:$0xff]
        %v544 = vld [vmem:[%s342 + $0x38] sm:$0xff]
        %v545 = vld [vmem:[#allocation10] sm:$0x1]
        %v546 = vmax.f32 %v537, 0.0
        %v547 = vmax.f32 %v538, 0.0
        %v548 = vmax.f32 %v539, 0.0
        %v549 = vmax.f32 %v540, 0.0
        %v550 = vmax.f32 %v541, 0.0
        %v551 = vmax.f32 %v542, 0.0
        %v552 = vmax.f32 %v543, 0.0
        %v553 = vmax.f32 %v544, 0.0
        %v554 = vpack.c.bf16 %v547, %v546
        %v555 = vpack.c.bf16 %v549, %v548
        %v556 = vpack.c.bf16 %v551, %v550
        %v557 = vpack.c.bf16 %v553, %v552
        %v558 = vld [vmem:[#allocation7] sm:$0xf]
        %v559 = vld [vmem:[#allocation7 + $0x4] sm:$0xf]
        %v560 = vld [vmem:[#allocation7 + $0x8] sm:$0xf]
        %v561 = vld [vmem:[#allocation7 + $0xc] sm:$0xf]
        %v562 = vld [vmem:[#allocation7 + $0x10] sm:$0xf]
        %v563 = vld [vmem:[#allocation7 + $0x14] sm:$0xf]
        %v564 = vld [vmem:[#allocation7 + $0x18] sm:$0xf]
        %v565 = vld [vmem:[#allocation7 + $0x1c] sm:$0xf]
        %v566 = vld [vmem:[#allocation7 + $0x20] sm:$0xf]
        %v567 = vld [vmem:[#allocation7 + $0x24] sm:$0xf]
        %v568 = vld [vmem:[#allocation7 + $0x28] sm:$0xf]
        %v569 = vld [vmem:[#allocation7 + $0x2c] sm:$0xf]
        %v570 = vld [vmem:[#allocation7 + $0x30] sm:$0xf]
        %v571 = vld [vmem:[#allocation7 + $0x34] sm:$0xf]
        %v572 = vld [vmem:[#allocation7 + $0x38] sm:$0xf]
        %v573 = vld [vmem:[#allocation7 + $0x3c] sm:$0xf]
        %v575 = vperm.slane %v545, 0
        %v593 = vunpack.c.l.b16 %v558
        %v594 = vunpack.c.l.b16 %v559
        %v595 = vunpack.c.l.b16 %v560
        %v596 = vunpack.c.l.b16 %v561
        %v597 = vunpack.c.l.b16 %v562
        %v598 = vunpack.c.l.b16 %v563
        %v599 = vunpack.c.l.b16 %v564
        %v600 = vunpack.c.l.b16 %v565
        %v601 = vunpack.c.l.b16 %v566
        %v602 = vunpack.c.l.b16 %v567
        %v603 = vunpack.c.l.b16 %v568
        %v604 = vunpack.c.l.b16 %v569
        %v605 = vunpack.c.l.b16 %v570
        %v606 = vunpack.c.l.b16 %v571
        %v607 = vunpack.c.l.b16 %v572
        %v608 = vunpack.c.l.b16 %v573
        %v609 = vpack.c.b16 %v594, %v593
        %v610 = vpack.c.b16 %v596, %v595
        %v611 = vpack.c.b16 %v598, %v597
        %v612 = vpack.c.b16 %v600, %v599
        %v613 = vpack.c.b16 %v602, %v601
        %v614 = vpack.c.b16 %v604, %v603
        %v615 = vpack.c.b16 %v606, %v605
        %v616 = vpack.c.b16 %v608, %v607
        %625 = vmatpush.bf16.msra.mxu0 %v616
        %626 = vmatpush.bf16.msra.mxu0 %v615
        %627 = vmatpush.bf16.msra.mxu0 %v614
        %628 = vmatpush.bf16.msra.mxu0 %v613
        %629 = vmatpush.bf16.msra.mxu0 %v612
        %630 = vmatpush.bf16.msra.mxu0 %v611
        %631 = vmatpush.bf16.msra.mxu0 %v610
        %632 = vmatpush.bf16.msra.mxu0 %v609
        %633 = vmatmul.bf16.gmra.mxu0 %v554
        %v634 = vpop.f32.mrf.mxu0
        %v635 = vadd.f32 %v575, %v634
        %v636 = vpop.f32.mrf.mxu0
        %v637 = vadd.f32 %v575, %v636
        %638 = vmatmul.bf16.gmra.mxu0 %v555
        %v639 = vpop.f32.mrf.mxu0
        %v640 = vadd.f32 %v575, %v639
        %v641 = vpop.f32.mrf.mxu0
        %v642 = vadd.f32 %v575, %v641
        %643 = vmatmul.bf16.gmra.mxu0 %v556
        %v644 = vpop.f32.mrf.mxu0
        %v645 = vadd.f32 %v575, %v644
        %v646 = vpop.f32.mrf.mxu0
        %v647 = vadd.f32 %v575, %v646
        %648 = vmatmul.bf16.gmra.mxu0 %v557
        %v649 = vpop.f32.mrf.mxu0
        %v650 = vadd.f32 %v575, %v649
        %v651 = vpop.f32.mrf.mxu0
        %v652 = vadd.f32 %v575, %v651
        %653 = vdwg.mxu0
        %v654 = vld [vmem:[%s352] sm:$0xff]
        %v655 = vld [vmem:[%s352 + $0x8] sm:$0xff]
        %v656 = vld [vmem:[%s352 + $0x10] sm:$0xff]
        %v657 = vld [vmem:[%s352 + $0x18] sm:$0xff]
        %v658 = vld [vmem:[%s352 + $0x20] sm:$0xff]
        %v659 = vld [vmem:[%s352 + $0x28] sm:$0xff]
        %v660 = vld [vmem:[%s352 + $0x30] sm:$0xff]
        %v661 = vld [vmem:[%s352 + $0x38] sm:$0xff]
        %s662 = scalar_lea.vmem [#allocation10], 1
        %v663 = vld [vmem:[%s662] sm:$0x1]
        %v664 = vmax.f32 %v654, 0.0
        %v665 = vmax.f32 %v655, 0.0
        %v666 = vmax.f32 %v656, 0.0
        %v667 = vmax.f32 %v657, 0.0
        %v668 = vmax.f32 %v658, 0.0
        %v669 = vmax.f32 %v659, 0.0
        %v670 = vmax.f32 %v660, 0.0
        %v671 = vmax.f32 %v661, 0.0
        %v672 = vpack.c.bf16 %v665, %v664
        %v673 = vpack.c.bf16 %v667, %v666
        %v674 = vpack.c.bf16 %v669, %v668
        %v675 = vpack.c.bf16 %v671, %v670
        %v676 = vld [vmem:[#allocation8] sm:$0xf]
        %v677 = vld [vmem:[#allocation8 + $0x4] sm:$0xf]
        %v678 = vld [vmem:[#allocation8 + $0x8] sm:$0xf]
        %v679 = vld [vmem:[#allocation8 + $0xc] sm:$0xf]
        %v680 = vld [vmem:[#allocation8 + $0x10] sm:$0xf]
        %v681 = vld [vmem:[#allocation8 + $0x14] sm:$0xf]
        %v682 = vld [vmem:[#allocation8 + $0x18] sm:$0xf]
        %v683 = vld [vmem:[#allocation8 + $0x1c] sm:$0xf]
        %v684 = vld [vmem:[#allocation8 + $0x20] sm:$0xf]
        %v685 = vld [vmem:[#allocation8 + $0x24] sm:$0xf]
        %v686 = vld [vmem:[#allocation8 + $0x28] sm:$0xf]
        %v687 = vld [vmem:[#allocation8 + $0x2c] sm:$0xf]
        %v688 = vld [vmem:[#allocation8 + $0x30] sm:$0xf]
        %v689 = vld [vmem:[#allocation8 + $0x34] sm:$0xf]
        %v690 = vld [vmem:[#allocation8 + $0x38] sm:$0xf]
        %v691 = vld [vmem:[#allocation8 + $0x3c] sm:$0xf]
        %v693 = vperm.slane %v663, 0
        %v711 = vunpack.c.l.b16 %v676
        %v712 = vunpack.c.l.b16 %v677
        %v713 = vunpack.c.l.b16 %v678
        %v714 = vunpack.c.l.b16 %v679
        %v715 = vunpack.c.l.b16 %v680
        %v716 = vunpack.c.l.b16 %v681
        %v717 = vunpack.c.l.b16 %v682
        %v718 = vunpack.c.l.b16 %v683
        %v719 = vunpack.c.l.b16 %v684
        %v720 = vunpack.c.l.b16 %v685
        %v721 = vunpack.c.l.b16 %v686
        %v722 = vunpack.c.l.b16 %v687
        %v723 = vunpack.c.l.b16 %v688
        %v724 = vunpack.c.l.b16 %v689
        %v725 = vunpack.c.l.b16 %v690
        %v726 = vunpack.c.l.b16 %v691
        %v727 = vpack.c.b16 %v712, %v711
        %v728 = vpack.c.b16 %v714, %v713
        %v729 = vpack.c.b16 %v716, %v715
        %v730 = vpack.c.b16 %v718, %v717
        %v731 = vpack.c.b16 %v720, %v719
        %v732 = vpack.c.b16 %v722, %v721
        %v733 = vpack.c.b16 %v724, %v723
        %v734 = vpack.c.b16 %v726, %v725
        %743 = vmatpush.bf16.msra.mxu0 %v734
        %744 = vmatpush.bf16.msra.mxu0 %v733
        %745 = vmatpush.bf16.msra.mxu0 %v732
        %746 = vmatpush.bf16.msra.mxu0 %v731
        %747 = vmatpush.bf16.msra.mxu0 %v730
        %748 = vmatpush.bf16.msra.mxu0 %v729
        %749 = vmatpush.bf16.msra.mxu0 %v728
        %750 = vmatpush.bf16.msra.mxu0 %v727
        %751 = vmatmul.bf16.gmra.mxu0 %v672
        %v752 = vpop.f32.mrf.mxu0
        %v753 = vadd.f32 %v693, %v752
        %v754 = vpop.f32.mrf.mxu0
        %v755 = vadd.f32 %v693, %v754
        %756 = vmatmul.bf16.gmra.mxu0 %v673
        %v757 = vpop.f32.mrf.mxu0
        %v758 = vadd.f32 %v693, %v757
        %v759 = vpop.f32.mrf.mxu0
        %v760 = vadd.f32 %v693, %v759
        %761 = vmatmul.bf16.gmra.mxu0 %v674
        %v762 = vpop.f32.mrf.mxu0
        %v763 = vadd.f32 %v693, %v762
        %v764 = vpop.f32.mrf.mxu0
        %v765 = vadd.f32 %v693, %v764
        %766 = vmatmul.bf16.gmra.mxu0 %v675
        %v767 = vpop.f32.mrf.mxu0
        %v768 = vadd.f32 %v693, %v767
        %v769 = vpop.f32.mrf.mxu0
        %v770 = vadd.f32 %v693, %v769
        %771 = vdwg.mxu0
        %v772 = vmax.f32 %v635, 0.0
        %v773 = vmax.f32 %v637, 0.0
        %v774 = vmax.f32 %v640, 0.0
        %v775 = vmax.f32 %v642, 0.0
        %v776 = vmax.f32 %v645, 0.0
        %v777 = vmax.f32 %v647, 0.0
        %v778 = vmax.f32 %v650, 0.0
        %v779 = vmax.f32 %v652, 0.0
        %vm788 = vcmask 1040384
        %v789 = vrot.slane %v772, 7
        %v790 = vrot.slane %v773, 7
        %v791 = vsel %vm788, %v789, %v790
        %v792 = vrot.slane %v774, 7
        %v793 = vsel %vm788, %v790, %v792
        %v794 = vrot.slane %v775, 7
        %v795 = vsel %vm788, %v792, %v794
        %v796 = vrot.slane %v776, 7
        %v797 = vsel %vm788, %v794, %v796
        %v798 = vrot.slane %v777, 7
        %v799 = vsel %vm788, %v796, %v798
        %v800 = vrot.slane %v778, 7
        %v801 = vsel %vm788, %v798, %v800
        %v802 = vrot.slane %v779, 7
        %v803 = vsel %vm788, %v800, %v802
        %v812 = vsel %vm788, 0.0, %v789
        %vm813 = vcmask 1046528
        %v814 = vrot.slane %v772, 1
        %v815 = vrot.slane %v773, 1
        %v816 = vsel %vm813, %v814, %v815
        %v817 = vrot.slane %v774, 1
        %v818 = vsel %vm813, %v815, %v817
        %v819 = vrot.slane %v775, 1
        %v820 = vsel %vm813, %v817, %v819
        %v821 = vrot.slane %v776, 1
        %v822 = vsel %vm813, %v819, %v821
        %v823 = vrot.slane %v777, 1
        %v824 = vsel %vm813, %v821, %v823
        %v825 = vrot.slane %v778, 1
        %v826 = vsel %vm813, %v823, %v825
        %v827 = vrot.slane %v779, 1
        %v828 = vsel %vm813, %v825, %v827
        %v837 = vsel %vm813, %v827, 0.0
        %v838 = vsel %vm519, 0.0, %v812
        %v839 = vsel %vm520, 0.0, %v791
        %v840 = vsel %vm521, 0.0, %v793
        %v841 = vsel %vm522, 0.0, %v795
        %v842 = vsel %vm523, 0.0, %v797
        %v843 = vsel %vm524, 0.0, %v799
        %v844 = vsel %vm525, 0.0, %v801
        %v845 = vsel %vm526, 0.0, %v803
        %v846 = vsel %vm527, 0.0, %v816
        %v847 = vsel %vm528, 0.0, %v818
        %v848 = vsel %vm529, 0.0, %v820
        %v849 = vsel %vm530, 0.0, %v822
        %v850 = vsel %vm531, 0.0, %v824
        %v851 = vsel %vm532, 0.0, %v826
        %v852 = vsel %vm533, 0.0, %v828
        %v853 = vsel %vm534, 0.0, %v837
        %v854 = vpack.c.bf16 %v839, %v838
        %v855 = vpack.c.bf16 %v773, %v772
        %v856 = vpack.c.bf16 %v847, %v846
        %v857 = vpack.c.bf16 %v841, %v840
        %v858 = vpack.c.bf16 %v775, %v774
        %v859 = vpack.c.bf16 %v849, %v848
        %v860 = vpack.c.bf16 %v843, %v842
        %v861 = vpack.c.bf16 %v777, %v776
        %v862 = vpack.c.bf16 %v851, %v850
        %v863 = vpack.c.bf16 %v845, %v844
        %v864 = vpack.c.bf16 %v779, %v778
        %v865 = vpack.c.bf16 %v853, %v852
        %v866 = vld [vmem:[#allocation11] sm:$0xf]
        %v867 = vld [vmem:[#allocation11 + $0x4] sm:$0xf]
        %v868 = vld [vmem:[#allocation11 + $0x8] sm:$0xf]
        %v869 = vld [vmem:[#allocation11 + $0xc] sm:$0xf]
        %v870 = vld [vmem:[#allocation11 + $0x10] sm:$0xf]
        %v871 = vld [vmem:[#allocation11 + $0x14] sm:$0xf]
        %v872 = vld [vmem:[#allocation11 + $0x18] sm:$0xf]
        %v873 = vld [vmem:[#allocation11 + $0x1c] sm:$0xf]
        %v874 = vld [vmem:[#allocation11 + $0x20] sm:$0xf]
        %v875 = vld [vmem:[#allocation11 + $0x24] sm:$0xf]
        %v876 = vld [vmem:[#allocation11 + $0x28] sm:$0xf]
        %v877 = vld [vmem:[#allocation11 + $0x2c] sm:$0xf]
        %v878 = vld [vmem:[#allocation11 + $0x30] sm:$0xf]
        %v879 = vld [vmem:[#allocation11 + $0x34] sm:$0xf]
        %v880 = vld [vmem:[#allocation11 + $0x38] sm:$0xf]
        %v881 = vld [vmem:[#allocation11 + $0x3c] sm:$0xf]
        %v882 = vld [vmem:[#allocation11 + $0x40] sm:$0xf]
        %v883 = vld [vmem:[#allocation11 + $0x44] sm:$0xf]
        %v884 = vld [vmem:[#allocation11 + $0x48] sm:$0xf]
        %v885 = vld [vmem:[#allocation11 + $0x4c] sm:$0xf]
        %v886 = vld [vmem:[#allocation11 + $0x50] sm:$0xf]
        %v887 = vld [vmem:[#allocation11 + $0x54] sm:$0xf]
        %v888 = vld [vmem:[#allocation11 + $0x58] sm:$0xf]
        %v889 = vld [vmem:[#allocation11 + $0x5c] sm:$0xf]
        %v890 = vld [vmem:[#allocation11 + $0x60] sm:$0xf]
        %v891 = vld [vmem:[#allocation11 + $0x64] sm:$0xf]
        %v892 = vld [vmem:[#allocation11 + $0x68] sm:$0xf]
        %v893 = vld [vmem:[#allocation11 + $0x6c] sm:$0xf]
        %v894 = vld [vmem:[#allocation11 + $0x70] sm:$0xf]
        %v895 = vld [vmem:[#allocation11 + $0x74] sm:$0xf]
        %v896 = vld [vmem:[#allocation11 + $0x78] sm:$0xf]
        %v897 = vld [vmem:[#allocation11 + $0x7c] sm:$0xf]
        %v898 = vld [vmem:[#allocation11 + $0x80] sm:$0xf]
        %v899 = vld [vmem:[#allocation11 + $0x84] sm:$0xf]
        %v900 = vld [vmem:[#allocation11 + $0x88] sm:$0xf]
        %v901 = vld [vmem:[#allocation11 + $0x8c] sm:$0xf]
        %v902 = vld [vmem:[#allocation11 + $0x90] sm:$0xf]
        %v903 = vld [vmem:[#allocation11 + $0x94] sm:$0xf]
        %v904 = vld [vmem:[#allocation11 + $0x98] sm:$0xf]
        %v905 = vld [vmem:[#allocation11 + $0x9c] sm:$0xf]
        %v906 = vld [vmem:[#allocation11 + $0xa0] sm:$0xf]
        %v907 = vld [vmem:[#allocation11 + $0xa4] sm:$0xf]
        %v908 = vld [vmem:[#allocation11 + $0xa8] sm:$0xf]
        %v909 = vld [vmem:[#allocation11 + $0xac] sm:$0xf]
        %v910 = vld [vmem:[#allocation11 + $0xb0] sm:$0xf]
        %v911 = vld [vmem:[#allocation11 + $0xb4] sm:$0xf]
        %v912 = vld [vmem:[#allocation11 + $0xb8] sm:$0xf]
        %v913 = vld [vmem:[#allocation11 + $0xbc] sm:$0xf]
        %v914 = vld [vmem:[%s6] sm:$0x1]
        %v916 = vperm.slane %v914, 0
        %v966 = vunpack.c.l.b16 %v866
        %v967 = vunpack.c.l.b16 %v867
        %v968 = vunpack.c.l.b16 %v868
        %v969 = vunpack.c.l.b16 %v869
        %v970 = vunpack.c.l.b16 %v870
        %v971 = vunpack.c.l.b16 %v871
        %v972 = vunpack.c.l.b16 %v872
        %v973 = vunpack.c.l.b16 %v873
        %v974 = vunpack.c.l.b16 %v874
        %v975 = vunpack.c.l.b16 %v875
        %v976 = vunpack.c.l.b16 %v876
        %v977 = vunpack.c.l.b16 %v877
        %v978 = vunpack.c.l.b16 %v878
        %v979 = vunpack.c.l.b16 %v879
        %v980 = vunpack.c.l.b16 %v880
        %v981 = vunpack.c.l.b16 %v881
        %v982 = vunpack.c.l.b16 %v882
        %v983 = vunpack.c.l.b16 %v883
        %v984 = vunpack.c.l.b16 %v884
        %v985 = vunpack.c.l.b16 %v885
        %v986 = vunpack.c.l.b16 %v886
        %v987 = vunpack.c.l.b16 %v887
        %v988 = vunpack.c.l.b16 %v888
        %v989 = vunpack.c.l.b16 %v889
        %v990 = vunpack.c.l.b16 %v890
        %v991 = vunpack.c.l.b16 %v891
        %v992 = vunpack.c.l.b16 %v892
        %v993 = vunpack.c.l.b16 %v893
        %v994 = vunpack.c.l.b16 %v894
        %v995 = vunpack.c.l.b16 %v895
        %v996 = vunpack.c.l.b16 %v896
        %v997 = vunpack.c.l.b16 %v897
        %v998 = vunpack.c.l.b16 %v898
        %v999 = vunpack.c.l.b16 %v899
        %v1000 = vunpack.c.l.b16 %v900
        %v1001 = vunpack.c.l.b16 %v901
        %v1002 = vunpack.c.l.b16 %v902
        %v1003 = vunpack.c.l.b16 %v903
        %v1004 = vunpack.c.l.b16 %v904
        %v1005 = vunpack.c.l.b16 %v905
        %v1006 = vunpack.c.l.b16 %v906
        %v1007 = vunpack.c.l.b16 %v907
        %v1008 = vunpack.c.l.b16 %v908
        %v1009 = vunpack.c.l.b16 %v909
        %v1010 = vunpack.c.l.b16 %v910
        %v1011 = vunpack.c.l.b16 %v911
        %v1012 = vunpack.c.l.b16 %v912
        %v1013 = vunpack.c.l.b16 %v913
        %v1014 = vpack.c.b16 %v967, %v966
        %v1015 = vpack.c.b16 %v969, %v968
        %v1016 = vpack.c.b16 %v971, %v970
        %v1017 = vpack.c.b16 %v973, %v972
        %v1018 = vpack.c.b16 %v975, %v974
        %v1019 = vpack.c.b16 %v977, %v976
        %v1020 = vpack.c.b16 %v979, %v978
        %v1021 = vpack.c.b16 %v981, %v980
        %v1022 = vpack.c.b16 %v983, %v982
        %v1023 = vpack.c.b16 %v985, %v984
        %v1024 = vpack.c.b16 %v987, %v986
        %v1025 = vpack.c.b16 %v989, %v988
        %v1026 = vpack.c.b16 %v991, %v990
        %v1027 = vpack.c.b16 %v993, %v992
        %v1028 = vpack.c.b16 %v995, %v994
        %v1029 = vpack.c.b16 %v997, %v996
        %v1030 = vpack.c.b16 %v999, %v998
        %v1031 = vpack.c.b16 %v1001, %v1000
        %v1032 = vpack.c.b16 %v1003, %v1002
        %v1033 = vpack.c.b16 %v1005, %v1004
        %v1034 = vpack.c.b16 %v1007, %v1006
        %v1035 = vpack.c.b16 %v1009, %v1008
        %v1036 = vpack.c.b16 %v1011, %v1010
        %v1037 = vpack.c.b16 %v1013, %v1012
        %1062 = vmatpush.bf16.msra.mxu0 %v1021
        %1063 = vmatpush.bf16.msra.mxu0 %v1020
        %1064 = vmatpush.bf16.msra.mxu0 %v1019
        %1065 = vmatpush.bf16.msra.mxu0 %v1018
        %1066 = vmatpush.bf16.msra.mxu0 %v1017
        %1067 = vmatpush.bf16.msra.mxu0 %v1016
        %1068 = vmatpush.bf16.msra.mxu0 %v1015
        %1069 = vmatpush.bf16.msra.mxu0 %v1014
        %1070 = vmatmul.bf16.gmra.mxu0 %v854
        %v1071 = vpop.f32.mrf.mxu0
        %v1072 = vadd.f32 %v916, %v1071
        %v1073 = vpop.f32.mrf.mxu0
        %v1074 = vadd.f32 %v916, %v1073
        %1075 = vmatmul.bf16.gmra.mxu0 %v857
        %v1076 = vpop.f32.mrf.mxu0
        %v1077 = vadd.f32 %v916, %v1076
        %v1078 = vpop.f32.mrf.mxu0
        %v1079 = vadd.f32 %v916, %v1078
        %1080 = vmatmul.bf16.gmra.mxu0 %v860
        %v1081 = vpop.f32.mrf.mxu0
        %v1082 = vadd.f32 %v916, %v1081
        %v1083 = vpop.f32.mrf.mxu0
        %v1084 = vadd.f32 %v916, %v1083
        %1085 = vmatmul.bf16.gmra.mxu0 %v863
        %v1086 = vpop.f32.mrf.mxu0
        %v1087 = vadd.f32 %v916, %v1086
        %v1088 = vpop.f32.mrf.mxu0
        %v1089 = vadd.f32 %v916, %v1088
        %1090 = vdwg.mxu0
        %1091 = vmatpush.bf16.msra.mxu0 %v1029
        %1092 = vmatpush.bf16.msra.mxu0 %v1028
        %1093 = vmatpush.bf16.msra.mxu0 %v1027
        %1094 = vmatpush.bf16.msra.mxu0 %v1026
        %1095 = vmatpush.bf16.msra.mxu0 %v1025
        %1096 = vmatpush.bf16.msra.mxu0 %v1024
        %1097 = vmatpush.bf16.msra.mxu0 %v1023
        %1098 = vmatpush.bf16.msra.mxu0 %v1022
        %1099 = vmatmul.bf16.gmra.mxu0 %v855
        %v1100 = vpop.f32.mrf.mxu0
        %v1101 = vadd.f32 %v1072, %v1100
        %v1102 = vpop.f32.mrf.mxu0
        %v1103 = vadd.f32 %v1074, %v1102
        %1104 = vmatmul.bf16.gmra.mxu0 %v858
        %v1105 = vpop.f32.mrf.mxu0
        %v1106 = vadd.f32 %v1077, %v1105
        %v1107 = vpop.f32.mrf.mxu0
        %v1108 = vadd.f32 %v1079, %v1107
        %1109 = vmatmul.bf16.gmra.mxu0 %v861
        %v1110 = vpop.f32.mrf.mxu0
        %v1111 = vadd.f32 %v1082, %v1110
        %v1112 = vpop.f32.mrf.mxu0
        %v1113 = vadd.f32 %v1084, %v1112
        %1114 = vmatmul.bf16.gmra.mxu0 %v864
        %v1115 = vpop.f32.mrf.mxu0
        %v1116 = vadd.f32 %v1087, %v1115
        %v1117 = vpop.f32.mrf.mxu0
        %v1118 = vadd.f32 %v1089, %v1117
        %1119 = vdwg.mxu0
        %1120 = vmatpush.bf16.msra.mxu0 %v1037
        %1121 = vmatpush.bf16.msra.mxu0 %v1036
        %1122 = vmatpush.bf16.msra.mxu0 %v1035
        %1123 = vmatpush.bf16.msra.mxu0 %v1034
        %1124 = vmatpush.bf16.msra.mxu0 %v1033
        %1125 = vmatpush.bf16.msra.mxu0 %v1032
        %1126 = vmatpush.bf16.msra.mxu0 %v1031
        %1127 = vmatpush.bf16.msra.mxu0 %v1030
        %1128 = vmatmul.bf16.gmra.mxu0 %v856
        %v1129 = vpop.f32.mrf.mxu0
        %v1130 = vadd.f32 %v1101, %v1129
        %v1131 = vpop.f32.mrf.mxu0
        %v1132 = vadd.f32 %v1103, %v1131
        %1133 = vmatmul.bf16.gmra.mxu0 %v859
        %v1134 = vpop.f32.mrf.mxu0
        %v1135 = vadd.f32 %v1106, %v1134
        %v1136 = vpop.f32.mrf.mxu0
        %v1137 = vadd.f32 %v1108, %v1136
        %1138 = vmatmul.bf16.gmra.mxu0 %v862
        %v1139 = vpop.f32.mrf.mxu0
        %v1140 = vadd.f32 %v1111, %v1139
        %v1141 = vpop.f32.mrf.mxu0
        %v1142 = vadd.f32 %v1113, %v1141
        %1143 = vmatmul.bf16.gmra.mxu0 %v865
        %v1144 = vpop.f32.mrf.mxu0
        %v1145 = vadd.f32 %v1116, %v1144
        %v1146 = vpop.f32.mrf.mxu0
        %v1147 = vadd.f32 %v1118, %v1146
        %1148 = vdwg.mxu0
        %v1149 = vmax.f32 %v1130, 0.0
        %v1150 = vmax.f32 %v1132, 0.0
        %v1151 = vmax.f32 %v1135, 0.0
        %v1152 = vmax.f32 %v1137, 0.0
        %v1153 = vmax.f32 %v1140, 0.0
        %v1154 = vmax.f32 %v1142, 0.0
        %v1155 = vmax.f32 %v1145, 0.0
        %v1156 = vmax.f32 %v1147, 0.0
        %v1165 = vrot.slane %v1149, 7
        %v1166 = vrot.slane %v1150, 7
        %v1167 = vsel %vm788, %v1165, %v1166
        %v1168 = vrot.slane %v1151, 7
        %v1169 = vsel %vm788, %v1166, %v1168
        %v1170 = vrot.slane %v1152, 7
        %v1171 = vsel %vm788, %v1168, %v1170
        %v1172 = vrot.slane %v1153, 7
        %v1173 = vsel %vm788, %v1170, %v1172
        %v1174 = vrot.slane %v1154, 7
        %v1175 = vsel %vm788, %v1172, %v1174
        %v1176 = vrot.slane %v1155, 7
        %v1177 = vsel %vm788, %v1174, %v1176
        %v1178 = vrot.slane %v1156, 7
        %v1179 = vsel %vm788, %v1176, %v1178
        %v1188 = vsel %vm788, 0.0, %v1165
        %v1189 = vrot.slane %v1149, 1
        %v1190 = vrot.slane %v1150, 1
        %v1191 = vsel %vm813, %v1189, %v1190
        %v1192 = vrot.slane %v1151, 1
        %v1193 = vsel %vm813, %v1190, %v1192
        %v1194 = vrot.slane %v1152, 1
        %v1195 = vsel %vm813, %v1192, %v1194
        %v1196 = vrot.slane %v1153, 1
        %v1197 = vsel %vm813, %v1194, %v1196
        %v1198 = vrot.slane %v1154, 1
        %v1199 = vsel %vm813, %v1196, %v1198
        %v1200 = vrot.slane %v1155, 1
        %v1201 = vsel %vm813, %v1198, %v1200
        %v1202 = vrot.slane %v1156, 1
        %v1203 = vsel %vm813, %v1200, %v1202
        %v1212 = vsel %vm813, %v1202, 0.0
        %v1213 = vsel %vm519, 0.0, %v1188
        %v1214 = vsel %vm520, 0.0, %v1167
        %v1215 = vsel %vm521, 0.0, %v1169
        %v1216 = vsel %vm522, 0.0, %v1171
        %v1217 = vsel %vm523, 0.0, %v1173
        %v1218 = vsel %vm524, 0.0, %v1175
        %v1219 = vsel %vm525, 0.0, %v1177
        %v1220 = vsel %vm526, 0.0, %v1179
        %v1221 = vsel %vm527, 0.0, %v1191
        %v1222 = vsel %vm528, 0.0, %v1193
        %v1223 = vsel %vm529, 0.0, %v1195
        %v1224 = vsel %vm530, 0.0, %v1197
        %v1225 = vsel %vm531, 0.0, %v1199
        %v1226 = vsel %vm532, 0.0, %v1201
        %v1227 = vsel %vm533, 0.0, %v1203
        %v1228 = vsel %vm534, 0.0, %v1212
        %v1229 = vpack.c.bf16 %v1214, %v1213
        %v1230 = vpack.c.bf16 %v1150, %v1149
        %v1231 = vpack.c.bf16 %v1222, %v1221
        %v1232 = vpack.c.bf16 %v1216, %v1215
        %v1233 = vpack.c.bf16 %v1152, %v1151
        %v1234 = vpack.c.bf16 %v1224, %v1223
        %v1235 = vpack.c.bf16 %v1218, %v1217
        %v1236 = vpack.c.bf16 %v1154, %v1153
        %v1237 = vpack.c.bf16 %v1226, %v1225
        %v1238 = vpack.c.bf16 %v1220, %v1219
        %v1239 = vpack.c.bf16 %v1156, %v1155
        %v1240 = vpack.c.bf16 %v1228, %v1227
        %s1241 = scalar_lea.vmem [#allocation11], 192
        %v1242 = vld [vmem:[%s1241] sm:$0xf]
        %v1243 = vld [vmem:[%s1241 + $0x4] sm:$0xf]
        %v1244 = vld [vmem:[%s1241 + $0x8] sm:$0xf]
        %v1245 = vld [vmem:[%s1241 + $0xc] sm:$0xf]
        %v1246 = vld [vmem:[%s1241 + $0x10] sm:$0xf]
        %v1247 = vld [vmem:[%s1241 + $0x14] sm:$0xf]
        %v1248 = vld [vmem:[%s1241 + $0x18] sm:$0xf]
        %v1249 = vld [vmem:[%s1241 + $0x1c] sm:$0xf]
        %v1250 = vld [vmem:[%s1241 + $0x20] sm:$0xf]
        %v1251 = vld [vmem:[%s1241 + $0x24] sm:$0xf]
        %v1252 = vld [vmem:[%s1241 + $0x28] sm:$0xf]
        %v1253 = vld [vmem:[%s1241 + $0x2c] sm:$0xf]
        %v1254 = vld [vmem:[%s1241 + $0x30] sm:$0xf]
        %v1255 = vld [vmem:[%s1241 + $0x34] sm:$0xf]
        %v1256 = vld [vmem:[%s1241 + $0x38] sm:$0xf]
        %v1257 = vld [vmem:[%s1241 + $0x3c] sm:$0xf]
        %v1258 = vld [vmem:[%s1241 + $0x40] sm:$0xf]
        %v1259 = vld [vmem:[%s1241 + $0x44] sm:$0xf]
        %v1260 = vld [vmem:[%s1241 + $0x48] sm:$0xf]
        %v1261 = vld [vmem:[%s1241 + $0x4c] sm:$0xf]
        %v1262 = vld [vmem:[%s1241 + $0x50] sm:$0xf]
        %v1263 = vld [vmem:[%s1241 + $0x54] sm:$0xf]
        %v1264 = vld [vmem:[%s1241 + $0x58] sm:$0xf]
        %v1265 = vld [vmem:[%s1241 + $0x5c] sm:$0xf]
        %v1266 = vld [vmem:[%s1241 + $0x60] sm:$0xf]
        %v1267 = vld [vmem:[%s1241 + $0x64] sm:$0xf]
        %v1268 = vld [vmem:[%s1241 + $0x68] sm:$0xf]
        %v1269 = vld [vmem:[%s1241 + $0x6c] sm:$0xf]
        %v1270 = vld [vmem:[%s1241 + $0x70] sm:$0xf]
        %v1271 = vld [vmem:[%s1241 + $0x74] sm:$0xf]
        %v1272 = vld [vmem:[%s1241 + $0x78] sm:$0xf]
        %v1273 = vld [vmem:[%s1241 + $0x7c] sm:$0xf]
        %v1274 = vld [vmem:[%s1241 + $0x80] sm:$0xf]
        %v1275 = vld [vmem:[%s1241 + $0x84] sm:$0xf]
        %v1276 = vld [vmem:[%s1241 + $0x88] sm:$0xf]
        %v1277 = vld [vmem:[%s1241 + $0x8c] sm:$0xf]
        %v1278 = vld [vmem:[%s1241 + $0x90] sm:$0xf]
        %v1279 = vld [vmem:[%s1241 + $0x94] sm:$0xf]
        %v1280 = vld [vmem:[%s1241 + $0x98] sm:$0xf]
        %v1281 = vld [vmem:[%s1241 + $0x9c] sm:$0xf]
        %v1282 = vld [vmem:[%s1241 + $0xa0] sm:$0xf]
        %v1283 = vld [vmem:[%s1241 + $0xa4] sm:$0xf]
        %v1284 = vld [vmem:[%s1241 + $0xa8] sm:$0xf]
        %v1285 = vld [vmem:[%s1241 + $0xac] sm:$0xf]
        %v1286 = vld [vmem:[%s1241 + $0xb0] sm:$0xf]
        %v1287 = vld [vmem:[%s1241 + $0xb4] sm:$0xf]
        %v1288 = vld [vmem:[%s1241 + $0xb8] sm:$0xf]
        %v1289 = vld [vmem:[%s1241 + $0xbc] sm:$0xf]
        %s1290 = scalar_lea.vmem %s6, 1
        %v1291 = vld [vmem:[%s1290] sm:$0x1]
        %v1293 = vperm.slane %v1291, 0
        %v1343 = vunpack.c.l.b16 %v1242
        %v1344 = vunpack.c.l.b16 %v1243
        %v1345 = vunpack.c.l.b16 %v1244
        %v1346 = vunpack.c.l.b16 %v1245
        %v1347 = vunpack.c.l.b16 %v1246
        %v1348 = vunpack.c.l.b16 %v1247
        %v1349 = vunpack.c.l.b16 %v1248
        %v1350 = vunpack.c.l.b16 %v1249
        %v1351 = vunpack.c.l.b16 %v1250
        %v1352 = vunpack.c.l.b16 %v1251
        %v1353 = vunpack.c.l.b16 %v1252
        %v1354 = vunpack.c.l.b16 %v1253
        %v1355 = vunpack.c.l.b16 %v1254
        %v1356 = vunpack.c.l.b16 %v1255
        %v1357 = vunpack.c.l.b16 %v1256
        %v1358 = vunpack.c.l.b16 %v1257
        %v1359 = vunpack.c.l.b16 %v1258
        %v1360 = vunpack.c.l.b16 %v1259
        %v1361 = vunpack.c.l.b16 %v1260
        %v1362 = vunpack.c.l.b16 %v1261
        %v1363 = vunpack.c.l.b16 %v1262
        %v1364 = vunpack.c.l.b16 %v1263
        %v1365 = vunpack.c.l.b16 %v1264
        %v1366 = vunpack.c.l.b16 %v1265
        %v1367 = vunpack.c.l.b16 %v1266
        %v1368 = vunpack.c.l.b16 %v1267
        %v1369 = vunpack.c.l.b16 %v1268
        %v1370 = vunpack.c.l.b16 %v1269
        %v1371 = vunpack.c.l.b16 %v1270
        %v1372 = vunpack.c.l.b16 %v1271
        %v1373 = vunpack.c.l.b16 %v1272
        %v1374 = vunpack.c.l.b16 %v1273
        %v1375 = vunpack.c.l.b16 %v1274
        %v1376 = vunpack.c.l.b16 %v1275
        %v1377 = vunpack.c.l.b16 %v1276
        %v1378 = vunpack.c.l.b16 %v1277
        %v1379 = vunpack.c.l.b16 %v1278
        %v1380 = vunpack.c.l.b16 %v1279
        %v1381 = vunpack.c.l.b16 %v1280
        %v1382 = vunpack.c.l.b16 %v1281
        %v1383 = vunpack.c.l.b16 %v1282
        %v1384 = vunpack.c.l.b16 %v1283
        %v1385 = vunpack.c.l.b16 %v1284
        %v1386 = vunpack.c.l.b16 %v1285
        %v1387 = vunpack.c.l.b16 %v1286
        %v1388 = vunpack.c.l.b16 %v1287
        %v1389 = vunpack.c.l.b16 %v1288
        %v1390 = vunpack.c.l.b16 %v1289
        %v1391 = vpack.c.b16 %v1344, %v1343
        %v1392 = vpack.c.b16 %v1346, %v1345
        %v1393 = vpack.c.b16 %v1348, %v1347
        %v1394 = vpack.c.b16 %v1350, %v1349
        %v1395 = vpack.c.b16 %v1352, %v1351
        %v1396 = vpack.c.b16 %v1354, %v1353
        %v1397 = vpack.c.b16 %v1356, %v1355
        %v1398 = vpack.c.b16 %v1358, %v1357
        %v1399 = vpack.c.b16 %v1360, %v1359
        %v1400 = vpack.c.b16 %v1362, %v1361
        %v1401 = vpack.c.b16 %v1364, %v1363
        %v1402 = vpack.c.b16 %v1366, %v1365
        %v1403 = vpack.c.b16 %v1368, %v1367
        %v1404 = vpack.c.b16 %v1370, %v1369
        %v1405 = vpack.c.b16 %v1372, %v1371
        %v1406 = vpack.c.b16 %v1374, %v1373
        %v1407 = vpack.c.b16 %v1376, %v1375
        %v1408 = vpack.c.b16 %v1378, %v1377
        %v1409 = vpack.c.b16 %v1380, %v1379
        %v1410 = vpack.c.b16 %v1382, %v1381
        %v1411 = vpack.c.b16 %v1384, %v1383
        %v1412 = vpack.c.b16 %v1386, %v1385
        %v1413 = vpack.c.b16 %v1388, %v1387
        %v1414 = vpack.c.b16 %v1390, %v1389
        %1439 = vmatpush.bf16.msra.mxu0 %v1398
        %1440 = vmatpush.bf16.msra.mxu0 %v1397
        %1441 = vmatpush.bf16.msra.mxu0 %v1396
        %1442 = vmatpush.bf16.msra.mxu0 %v1395
        %1443 = vmatpush.bf16.msra.mxu0 %v1394
        %1444 = vmatpush.bf16.msra.mxu0 %v1393
        %1445 = vmatpush.bf16.msra.mxu0 %v1392
        %1446 = vmatpush.bf16.msra.mxu0 %v1391
        %1447 = vmatmul.bf16.gmra.mxu0 %v1229
        %v1448 = vpop.f32.mrf.mxu0
        %v1449 = vadd.f32 %v1293, %v1448
        %v1450 = vpop.f32.mrf.mxu0
        %v1451 = vadd.f32 %v1293, %v1450
        %1452 = vmatmul.bf16.gmra.mxu0 %v1232
        %v1453 = vpop.f32.mrf.mxu0
        %v1454 = vadd.f32 %v1293, %v1453
        %v1455 = vpop.f32.mrf.mxu0
        %v1456 = vadd.f32 %v1293, %v1455
        %1457 = vmatmul.bf16.gmra.mxu0 %v1235
        %v1458 = vpop.f32.mrf.mxu0
        %v1459 = vadd.f32 %v1293, %v1458
        %v1460 = vpop.f32.mrf.mxu0
        %v1461 = vadd.f32 %v1293, %v1460
        %1462 = vmatmul.bf16.gmra.mxu0 %v1238
        %v1463 = vpop.f32.mrf.mxu0
        %v1464 = vadd.f32 %v1293, %v1463
        %v1465 = vpop.f32.mrf.mxu0
        %v1466 = vadd.f32 %v1293, %v1465
        %1467 = vdwg.mxu0
        %1468 = vmatpush.bf16.msra.mxu0 %v1406
        %1469 = vmatpush.bf16.msra.mxu0 %v1405
        %1470 = vmatpush.bf16.msra.mxu0 %v1404
        %1471 = vmatpush.bf16.msra.mxu0 %v1403
        %1472 = vmatpush.bf16.msra.mxu0 %v1402
        %1473 = vmatpush.bf16.msra.mxu0 %v1401
        %1474 = vmatpush.bf16.msra.mxu0 %v1400
        %1475 = vmatpush.bf16.msra.mxu0 %v1399
        %1476 = vmatmul.bf16.gmra.mxu0 %v1230
        %v1477 = vpop.f32.mrf.mxu0
        %v1478 = vadd.f32 %v1449, %v1477
        %v1479 = vpop.f32.mrf.mxu0
        %v1480 = vadd.f32 %v1451, %v1479
        %1481 = vmatmul.bf16.gmra.mxu0 %v1233
        %v1482 = vpop.f32.mrf.mxu0
        %v1483 = vadd.f32 %v1454, %v1482
        %v1484 = vpop.f32.mrf.mxu0
        %v1485 = vadd.f32 %v1456, %v1484
        %1486 = vmatmul.bf16.gmra.mxu0 %v1236
        %v1487 = vpop.f32.mrf.mxu0
        %v1488 = vadd.f32 %v1459, %v1487
        %v1489 = vpop.f32.mrf.mxu0
        %v1490 = vadd.f32 %v1461, %v1489
        %1491 = vmatmul.bf16.gmra.mxu0 %v1239
        %v1492 = vpop.f32.mrf.mxu0
        %v1493 = vadd.f32 %v1464, %v1492
        %v1494 = vpop.f32.mrf.mxu0
        %v1495 = vadd.f32 %v1466, %v1494
        %1496 = vdwg.mxu0
        %1497 = vmatpush.bf16.msra.mxu0 %v1414
        %1498 = vmatpush.bf16.msra.mxu0 %v1413
        %1499 = vmatpush.bf16.msra.mxu0 %v1412
        %1500 = vmatpush.bf16.msra.mxu0 %v1411
        %1501 = vmatpush.bf16.msra.mxu0 %v1410
        %1502 = vmatpush.bf16.msra.mxu0 %v1409
        %1503 = vmatpush.bf16.msra.mxu0 %v1408
        %1504 = vmatpush.bf16.msra.mxu0 %v1407
        %1505 = vmatmul.bf16.gmra.mxu0 %v1231
        %v1506 = vpop.f32.mrf.mxu0
        %v1507 = vadd.f32 %v1478, %v1506
        %v1508 = vpop.f32.mrf.mxu0
        %v1509 = vadd.f32 %v1480, %v1508
        %1510 = vmatmul.bf16.gmra.mxu0 %v1234
        %v1511 = vpop.f32.mrf.mxu0
        %v1512 = vadd.f32 %v1483, %v1511
        %v1513 = vpop.f32.mrf.mxu0
        %v1514 = vadd.f32 %v1485, %v1513
        %1515 = vmatmul.bf16.gmra.mxu0 %v1237
        %v1516 = vpop.f32.mrf.mxu0
        %v1517 = vadd.f32 %v1488, %v1516
        %v1518 = vpop.f32.mrf.mxu0
        %v1519 = vadd.f32 %v1490, %v1518
        %1520 = vmatmul.bf16.gmra.mxu0 %v1240
        %v1521 = vpop.f32.mrf.mxu0
        %v1522 = vadd.f32 %v1493, %v1521
        %v1523 = vpop.f32.mrf.mxu0
        %v1524 = vadd.f32 %v1495, %v1523
        %1525 = vdwg.mxu0
        %v1526 = vadd.f32 %v1507, %v753
        %v1527 = vadd.f32 %v1509, %v755
        %v1528 = vadd.f32 %v1512, %v758
        %v1529 = vadd.f32 %v1514, %v760
        %v1530 = vadd.f32 %v1517, %v763
        %v1531 = vadd.f32 %v1519, %v765
        %v1532 = vadd.f32 %v1522, %v768
        %v1533 = vadd.f32 %v1524, %v770
        %1534 = vst [vmem:[%s408] sm:$0xff] %v1526
        %1535 = vst [vmem:[%s408 + $0x8] sm:$0xff] %v1527
        %1536 = vst [vmem:[%s408 + $0x40] sm:$0xff] %v1528
        %1537 = vst [vmem:[%s408 + $0x48] sm:$0xff] %v1529
        %1538 = vst [vmem:[%s408 + $0x80] sm:$0xff] %v1530
        %1539 = vst [vmem:[%s408 + $0x88] sm:$0xff] %v1531
        %1540 = vst [vmem:[%s408 + $0xc0] sm:$0xff] %v1532
        %1541 = vst [vmem:[%s408 + $0xc8] sm:$0xff] %v1533
        %v1542 = vmax.f32 %v753, 0.0
        %v1543 = vmax.f32 %v755, 0.0
        %v1544 = vmax.f32 %v758, 0.0
        %v1545 = vmax.f32 %v760, 0.0
        %v1546 = vmax.f32 %v763, 0.0
        %v1547 = vmax.f32 %v765, 0.0
        %v1548 = vmax.f32 %v768, 0.0
        %v1549 = vmax.f32 %v770, 0.0
        %v1558 = vrot.slane %v1542, 7
        %v1559 = vrot.slane %v1543, 7
        %v1560 = vsel %vm788, %v1558, %v1559
        %v1561 = vrot.slane %v1544, 7
        %v1562 = vsel %vm788, %v1559, %v1561
        %v1563 = vrot.slane %v1545, 7
        %v1564 = vsel %vm788, %v1561, %v1563
        %v1565 = vrot.slane %v1546, 7
        %v1566 = vsel %vm788, %v1563, %v1565
        %v1567 = vrot.slane %v1547, 7
        %v1568 = vsel %vm788, %v1565, %v1567
        %v1569 = vrot.slane %v1548, 7
        %v1570 = vsel %vm788, %v1567, %v1569
        %v1571 = vrot.slane %v1549, 7
        %v1572 = vsel %vm788, %v1569, %v1571
        %v1581 = vsel %vm788, 0.0, %v1558
        %v1582 = vrot.slane %v1542, 1
        %v1583 = vrot.slane %v1543, 1
        %v1584 = vsel %vm813, %v1582, %v1583
        %v1585 = vrot.slane %v1544, 1
        %v1586 = vsel %vm813, %v1583, %v1585
        %v1587 = vrot.slane %v1545, 1
        %v1588 = vsel %vm813, %v1585, %v1587
        %v1589 = vrot.slane %v1546, 1
        %v1590 = vsel %vm813, %v1587, %v1589
        %v1591 = vrot.slane %v1547, 1
        %v1592 = vsel %vm813, %v1589, %v1591
        %v1593 = vrot.slane %v1548, 1
        %v1594 = vsel %vm813, %v1591, %v1593
        %v1595 = vrot.slane %v1549, 1
        %v1596 = vsel %vm813, %v1593, %v1595
        %v1605 = vsel %vm813, %v1595, 0.0
        %v1606 = vsel %vm519, 0.0, %v1581
        %v1607 = vsel %vm520, 0.0, %v1560
        %v1608 = vsel %vm521, 0.0, %v1562
        %v1609 = vsel %vm522, 0.0, %v1564
        %v1610 = vsel %vm523, 0.0, %v1566
        %v1611 = vsel %vm524, 0.0, %v1568
        %v1612 = vsel %vm525, 0.0, %v1570
        %v1613 = vsel %vm526, 0.0, %v1572
        %v1614 = vsel %vm527, 0.0, %v1584
        %v1615 = vsel %vm528, 0.0, %v1586
        %v1616 = vsel %vm529, 0.0, %v1588
        %v1617 = vsel %vm530, 0.0, %v1590
        %v1618 = vsel %vm531, 0.0, %v1592
        %v1619 = vsel %vm532, 0.0, %v1594
        %v1620 = vsel %vm533, 0.0, %v1596
        %v1621 = vsel %vm534, 0.0, %v1605
        %v1622 = vpack.c.bf16 %v1607, %v1606
        %v1623 = vpack.c.bf16 %v1543, %v1542
        %v1624 = vpack.c.bf16 %v1615, %v1614
        %v1625 = vpack.c.bf16 %v1609, %v1608
        %v1626 = vpack.c.bf16 %v1545, %v1544
        %v1627 = vpack.c.bf16 %v1617, %v1616
        %v1628 = vpack.c.bf16 %v1611, %v1610
        %v1629 = vpack.c.bf16 %v1547, %v1546
        %v1630 = vpack.c.bf16 %v1619, %v1618
        %v1631 = vpack.c.bf16 %v1613, %v1612
        %v1632 = vpack.c.bf16 %v1549, %v1548
        %v1633 = vpack.c.bf16 %v1621, %v1620
        %s1634 = scalar_lea.vmem [#allocation11], 384
        %v1635 = vld [vmem:[%s1634] sm:$0xf]
        %v1636 = vld [vmem:[%s1634 + $0x4] sm:$0xf]
        %v1637 = vld [vmem:[%s1634 + $0x8] sm:$0xf]
        %v1638 = vld [vmem:[%s1634 + $0xc] sm:$0xf]
        %v1639 = vld [vmem:[%s1634 + $0x10] sm:$0xf]
        %v1640 = vld [vmem:[%s1634 + $0x14] sm:$0xf]
        %v1641 = vld [vmem:[%s1634 + $0x18] sm:$0xf]
        %v1642 = vld [vmem:[%s1634 + $0x1c] sm:$0xf]
        %v1643 = vld [vmem:[%s1634 + $0x20] sm:$0xf]
        %v1644 = vld [vmem:[%s1634 + $0x24] sm:$0xf]
        %v1645 = vld [vmem:[%s1634 + $0x28] sm:$0xf]
        %v1646 = vld [vmem:[%s1634 + $0x2c] sm:$0xf]
        %v1647 = vld [vmem:[%s1634 + $0x30] sm:$0xf]
        %v1648 = vld [vmem:[%s1634 + $0x34] sm:$0xf]
        %v1649 = vld [vmem:[%s1634 + $0x38] sm:$0xf]
        %v1650 = vld [vmem:[%s1634 + $0x3c] sm:$0xf]
        %v1651 = vld [vmem:[%s1634 + $0x40] sm:$0xf]
        %v1652 = vld [vmem:[%s1634 + $0x44] sm:$0xf]
        %v1653 = vld [vmem:[%s1634 + $0x48] sm:$0xf]
        %v1654 = vld [vmem:[%s1634 + $0x4c] sm:$0xf]
        %v1655 = vld [vmem:[%s1634 + $0x50] sm:$0xf]
        %v1656 = vld [vmem:[%s1634 + $0x54] sm:$0xf]
        %v1657 = vld [vmem:[%s1634 + $0x58] sm:$0xf]
        %v1658 = vld [vmem:[%s1634 + $0x5c] sm:$0xf]
        %v1659 = vld [vmem:[%s1634 + $0x60] sm:$0xf]
        %v1660 = vld [vmem:[%s1634 + $0x64] sm:$0xf]
        %v1661 = vld [vmem:[%s1634 + $0x68] sm:$0xf]
        %v1662 = vld [vmem:[%s1634 + $0x6c] sm:$0xf]
        %v1663 = vld [vmem:[%s1634 + $0x70] sm:$0xf]
        %v1664 = vld [vmem:[%s1634 + $0x74] sm:$0xf]
        %v1665 = vld [vmem:[%s1634 + $0x78] sm:$0xf]
        %v1666 = vld [vmem:[%s1634 + $0x7c] sm:$0xf]
        %v1667 = vld [vmem:[%s1634 + $0x80] sm:$0xf]
        %v1668 = vld [vmem:[%s1634 + $0x84] sm:$0xf]
        %v1669 = vld [vmem:[%s1634 + $0x88] sm:$0xf]
        %v1670 = vld [vmem:[%s1634 + $0x8c] sm:$0xf]
        %v1671 = vld [vmem:[%s1634 + $0x90] sm:$0xf]
        %v1672 = vld [vmem:[%s1634 + $0x94] sm:$0xf]
        %v1673 = vld [vmem:[%s1634 + $0x98] sm:$0xf]
        %v1674 = vld [vmem:[%s1634 + $0x9c] sm:$0xf]
        %v1675 = vld [vmem:[%s1634 + $0xa0] sm:$0xf]
        %v1676 = vld [vmem:[%s1634 + $0xa4] sm:$0xf]
        %v1677 = vld [vmem:[%s1634 + $0xa8] sm:$0xf]
        %v1678 = vld [vmem:[%s1634 + $0xac] sm:$0xf]
        %v1679 = vld [vmem:[%s1634 + $0xb0] sm:$0xf]
        %v1680 = vld [vmem:[%s1634 + $0xb4] sm:$0xf]
        %v1681 = vld [vmem:[%s1634 + $0xb8] sm:$0xf]
        %v1682 = vld [vmem:[%s1634 + $0xbc] sm:$0xf]
        %s1683 = scalar_lea.vmem %s6, 2
        %v1684 = vld [vmem:[%s1683] sm:$0x1]
        %v1686 = vperm.slane %v1684, 0
        %v1736 = vunpack.c.l.b16 %v1635
        %v1737 = vunpack.c.l.b16 %v1636
        %v1738 = vunpack.c.l.b16 %v1637
        %v1739 = vunpack.c.l.b16 %v1638
        %v1740 = vunpack.c.l.b16 %v1639
        %v1741 = vunpack.c.l.b16 %v1640
        %v1742 = vunpack.c.l.b16 %v1641
        %v1743 = vunpack.c.l.b16 %v1642
        %v1744 = vunpack.c.l.b16 %v1643
        %v1745 = vunpack.c.l.b16 %v1644
        %v1746 = vunpack.c.l.b16 %v1645
        %v1747 = vunpack.c.l.b16 %v1646
        %v1748 = vunpack.c.l.b16 %v1647
        %v1749 = vunpack.c.l.b16 %v1648
        %v1750 = vunpack.c.l.b16 %v1649
        %v1751 = vunpack.c.l.b16 %v1650
        %v1752 = vunpack.c.l.b16 %v1651
        %v1753 = vunpack.c.l.b16 %v1652
        %v1754 = vunpack.c.l.b16 %v1653
        %v1755 = vunpack.c.l.b16 %v1654
        %v1756 = vunpack.c.l.b16 %v1655
        %v1757 = vunpack.c.l.b16 %v1656
        %v1758 = vunpack.c.l.b16 %v1657
        %v1759 = vunpack.c.l.b16 %v1658
        %v1760 = vunpack.c.l.b16 %v1659
        %v1761 = vunpack.c.l.b16 %v1660
        %v1762 = vunpack.c.l.b16 %v1661
        %v1763 = vunpack.c.l.b16 %v1662
        %v1764 = vunpack.c.l.b16 %v1663
        %v1765 = vunpack.c.l.b16 %v1664
        %v1766 = vunpack.c.l.b16 %v1665
        %v1767 = vunpack.c.l.b16 %v1666
        %v1768 = vunpack.c.l.b16 %v1667
        %v1769 = vunpack.c.l.b16 %v1668
        %v1770 = vunpack.c.l.b16 %v1669
        %v1771 = vunpack.c.l.b16 %v1670
        %v1772 = vunpack.c.l.b16 %v1671
        %v1773 = vunpack.c.l.b16 %v1672
        %v1774 = vunpack.c.l.b16 %v1673
        %v1775 = vunpack.c.l.b16 %v1674
        %v1776 = vunpack.c.l.b16 %v1675
        %v1777 = vunpack.c.l.b16 %v1676
        %v1778 = vunpack.c.l.b16 %v1677
        %v1779 = vunpack.c.l.b16 %v1678
        %v1780 = vunpack.c.l.b16 %v1679
        %v1781 = vunpack.c.l.b16 %v1680
        %v1782 = vunpack.c.l.b16 %v1681
        %v1783 = vunpack.c.l.b16 %v1682
        %v1784 = vpack.c.b16 %v1737, %v1736
        %v1785 = vpack.c.b16 %v1739, %v1738
        %v1786 = vpack.c.b16 %v1741, %v1740
        %v1787 = vpack.c.b16 %v1743, %v1742
        %v1788 = vpack.c.b16 %v1745, %v1744
        %v1789 = vpack.c.b16 %v1747, %v1746
        %v1790 = vpack.c.b16 %v1749, %v1748
        %v1791 = vpack.c.b16 %v1751, %v1750
        %v1792 = vpack.c.b16 %v1753, %v1752
        %v1793 = vpack.c.b16 %v1755, %v1754
        %v1794 = vpack.c.b16 %v1757, %v1756
        %v1795 = vpack.c.b16 %v1759, %v1758
        %v1796 = vpack.c.b16 %v1761, %v1760
        %v1797 = vpack.c.b16 %v1763, %v1762
        %v1798 = vpack.c.b16 %v1765, %v1764
        %v1799 = vpack.c.b16 %v1767, %v1766
        %v1800 = vpack.c.b16 %v1769, %v1768
        %v1801 = vpack.c.b16 %v1771, %v1770
        %v1802 = vpack.c.b16 %v1773, %v1772
        %v1803 = vpack.c.b16 %v1775, %v1774
        %v1804 = vpack.c.b16 %v1777, %v1776
        %v1805 = vpack.c.b16 %v1779, %v1778
        %v1806 = vpack.c.b16 %v1781, %v1780
        %v1807 = vpack.c.b16 %v1783, %v1782
        %1832 = vmatpush.bf16.msra.mxu0 %v1791
        %1833 = vmatpush.bf16.msra.mxu0 %v1790
        %1834 = vmatpush.bf16.msra.mxu0 %v1789
        %1835 = vmatpush.bf16.msra.mxu0 %v1788
        %1836 = vmatpush.bf16.msra.mxu0 %v1787
        %1837 = vmatpush.bf16.msra.mxu0 %v1786
        %1838 = vmatpush.bf16.msra.mxu0 %v1785
        %1839 = vmatpush.bf16.msra.mxu0 %v1784
        %1840 = vmatmul.bf16.gmra.mxu0 %v1622
        %v1841 = vpop.f32.mrf.mxu0
        %v1842 = vadd.f32 %v1686, %v1841
        %v1843 = vpop.f32.mrf.mxu0
        %v1844 = vadd.f32 %v1686, %v1843
        %1845 = vmatmul.bf16.gmra.mxu0 %v1625
        %v1846 = vpop.f32.mrf.mxu0
        %v1847 = vadd.f32 %v1686, %v1846
        %v1848 = vpop.f32.mrf.mxu0
        %v1849 = vadd.f32 %v1686, %v1848
        %1850 = vmatmul.bf16.gmra.mxu0 %v1628
        %v1851 = vpop.f32.mrf.mxu0
        %v1852 = vadd.f32 %v1686, %v1851
        %v1853 = vpop.f32.mrf.mxu0
        %v1854 = vadd.f32 %v1686, %v1853
        %1855 = vmatmul.bf16.gmra.mxu0 %v1631
        %v1856 = vpop.f32.mrf.mxu0
        %v1857 = vadd.f32 %v1686, %v1856
        %v1858 = vpop.f32.mrf.mxu0
        %v1859 = vadd.f32 %v1686, %v1858
        %1860 = vdwg.mxu0
        %1861 = vmatpush.bf16.msra.mxu0 %v1799
        %1862 = vmatpush.bf16.msra.mxu0 %v1798
        %1863 = vmatpush.bf16.msra.mxu0 %v1797
        %1864 = vmatpush.bf16.msra.mxu0 %v1796
        %1865 = vmatpush.bf16.msra.mxu0 %v1795
        %1866 = vmatpush.bf16.msra.mxu0 %v1794
        %1867 = vmatpush.bf16.msra.mxu0 %v1793
        %1868 = vmatpush.bf16.msra.mxu0 %v1792
        %1869 = vmatmul.bf16.gmra.mxu0 %v1623
        %v1870 = vpop.f32.mrf.mxu0
        %v1871 = vadd.f32 %v1842, %v1870
        %v1872 = vpop.f32.mrf.mxu0
        %v1873 = vadd.f32 %v1844, %v1872
        %1874 = vmatmul.bf16.gmra.mxu0 %v1626
        %v1875 = vpop.f32.mrf.mxu0
        %v1876 = vadd.f32 %v1847, %v1875
        %v1877 = vpop.f32.mrf.mxu0
        %v1878 = vadd.f32 %v1849, %v1877
        %1879 = vmatmul.bf16.gmra.mxu0 %v1629
        %v1880 = vpop.f32.mrf.mxu0
        %v1881 = vadd.f32 %v1852, %v1880
        %v1882 = vpop.f32.mrf.mxu0
        %v1883 = vadd.f32 %v1854, %v1882
        %1884 = vmatmul.bf16.gmra.mxu0 %v1632
        %v1885 = vpop.f32.mrf.mxu0
        %v1886 = vadd.f32 %v1857, %v1885
        %v1887 = vpop.f32.mrf.mxu0
        %v1888 = vadd.f32 %v1859, %v1887
        %1889 = vdwg.mxu0
        %1890 = vmatpush.bf16.msra.mxu0 %v1807
        %1891 = vmatpush.bf16.msra.mxu0 %v1806
        %1892 = vmatpush.bf16.msra.mxu0 %v1805
        %1893 = vmatpush.bf16.msra.mxu0 %v1804
        %1894 = vmatpush.bf16.msra.mxu0 %v1803
        %1895 = vmatpush.bf16.msra.mxu0 %v1802
        %1896 = vmatpush.bf16.msra.mxu0 %v1801
        %1897 = vmatpush.bf16.msra.mxu0 %v1800
        %1898 = vmatmul.bf16.gmra.mxu0 %v1624
        %v1899 = vpop.f32.mrf.mxu0
        %v1900 = vadd.f32 %v1871, %v1899
        %v1901 = vpop.f32.mrf.mxu0
        %v1902 = vadd.f32 %v1873, %v1901
        %1903 = vmatmul.bf16.gmra.mxu0 %v1627
        %v1904 = vpop.f32.mrf.mxu0
        %v1905 = vadd.f32 %v1876, %v1904
        %v1906 = vpop.f32.mrf.mxu0
        %v1907 = vadd.f32 %v1878, %v1906
        %1908 = vmatmul.bf16.gmra.mxu0 %v1630
        %v1909 = vpop.f32.mrf.mxu0
        %v1910 = vadd.f32 %v1881, %v1909
        %v1911 = vpop.f32.mrf.mxu0
        %v1912 = vadd.f32 %v1883, %v1911
        %1913 = vmatmul.bf16.gmra.mxu0 %v1633
        %v1914 = vpop.f32.mrf.mxu0
        %v1915 = vadd.f32 %v1886, %v1914
        %v1916 = vpop.f32.mrf.mxu0
        %v1917 = vadd.f32 %v1888, %v1916
        %1918 = vdwg.mxu0
        %v1919 = vmax.f32 %v1900, 0.0
        %v1920 = vmax.f32 %v1902, 0.0
        %v1921 = vmax.f32 %v1905, 0.0
        %v1922 = vmax.f32 %v1907, 0.0
        %v1923 = vmax.f32 %v1910, 0.0
        %v1924 = vmax.f32 %v1912, 0.0
        %v1925 = vmax.f32 %v1915, 0.0
        %v1926 = vmax.f32 %v1917, 0.0
        %v1935 = vrot.slane %v1919, 7
        %v1936 = vrot.slane %v1920, 7
        %v1937 = vsel %vm788, %v1935, %v1936
        %v1938 = vrot.slane %v1921, 7
        %v1939 = vsel %vm788, %v1936, %v1938
        %v1940 = vrot.slane %v1922, 7
        %v1941 = vsel %vm788, %v1938, %v1940
        %v1942 = vrot.slane %v1923, 7
        %v1943 = vsel %vm788, %v1940, %v1942
        %v1944 = vrot.slane %v1924, 7
        %v1945 = vsel %vm788, %v1942, %v1944
        %v1946 = vrot.slane %v1925, 7
        %v1947 = vsel %vm788, %v1944, %v1946
        %v1948 = vrot.slane %v1926, 7
        %v1949 = vsel %vm788, %v1946, %v1948
        %v1958 = vsel %vm788, 0.0, %v1935
        %v1959 = vrot.slane %v1919, 1
        %v1960 = vrot.slane %v1920, 1
        %v1961 = vsel %vm813, %v1959, %v1960
        %v1962 = vrot.slane %v1921, 1
        %v1963 = vsel %vm813, %v1960, %v1962
        %v1964 = vrot.slane %v1922, 1
        %v1965 = vsel %vm813, %v1962, %v1964
        %v1966 = vrot.slane %v1923, 1
        %v1967 = vsel %vm813, %v1964, %v1966
        %v1968 = vrot.slane %v1924, 1
        %v1969 = vsel %vm813, %v1966, %v1968
        %v1970 = vrot.slane %v1925, 1
        %v1971 = vsel %vm813, %v1968, %v1970
        %v1972 = vrot.slane %v1926, 1
        %v1973 = vsel %vm813, %v1970, %v1972
        %v1982 = vsel %vm813, %v1972, 0.0
        %v1983 = vsel %vm519, 0.0, %v1958
        %v1984 = vsel %vm520, 0.0, %v1937
        %v1985 = vsel %vm521, 0.0, %v1939
        %v1986 = vsel %vm522, 0.0, %v1941
        %v1987 = vsel %vm523, 0.0, %v1943
        %v1988 = vsel %vm524, 0.0, %v1945
        %v1989 = vsel %vm525, 0.0, %v1947
        %v1990 = vsel %vm526, 0.0, %v1949
        %v1991 = vsel %vm527, 0.0, %v1961
        %v1992 = vsel %vm528, 0.0, %v1963
        %v1993 = vsel %vm529, 0.0, %v1965
        %v1994 = vsel %vm530, 0.0, %v1967
        %v1995 = vsel %vm531, 0.0, %v1969
        %v1996 = vsel %vm532, 0.0, %v1971
        %v1997 = vsel %vm533, 0.0, %v1973
        %v1998 = vsel %vm534, 0.0, %v1982
        %v1999 = vpack.c.bf16 %v1984, %v1983
        %v2000 = vpack.c.bf16 %v1920, %v1919
        %v2001 = vpack.c.bf16 %v1992, %v1991
        %v2002 = vpack.c.bf16 %v1986, %v1985
        %v2003 = vpack.c.bf16 %v1922, %v1921
        %v2004 = vpack.c.bf16 %v1994, %v1993
        %v2005 = vpack.c.bf16 %v1988, %v1987
        %v2006 = vpack.c.bf16 %v1924, %v1923
        %v2007 = vpack.c.bf16 %v1996, %v1995
        %v2008 = vpack.c.bf16 %v1990, %v1989
        %v2009 = vpack.c.bf16 %v1926, %v1925
        %v2010 = vpack.c.bf16 %v1998, %v1997
        %s2011 = scalar_lea.vmem [#allocation11], 576
        %v2012 = vld [vmem:[%s2011] sm:$0xf]
        %v2013 = vld [vmem:[%s2011 + $0x4] sm:$0xf]
        %v2014 = vld [vmem:[%s2011 + $0x8] sm:$0xf]
        %v2015 = vld [vmem:[%s2011 + $0xc] sm:$0xf]
        %v2016 = vld [vmem:[%s2011 + $0x10] sm:$0xf]
        %v2017 = vld [vmem:[%s2011 + $0x14] sm:$0xf]
        %v2018 = vld [vmem:[%s2011 + $0x18] sm:$0xf]
        %v2019 = vld [vmem:[%s2011 + $0x1c] sm:$0xf]
        %v2020 = vld [vmem:[%s2011 + $0x20] sm:$0xf]
        %v2021 = vld [vmem:[%s2011 + $0x24] sm:$0xf]
        %v2022 = vld [vmem:[%s2011 + $0x28] sm:$0xf]
        %v2023 = vld [vmem:[%s2011 + $0x2c] sm:$0xf]
        %v2024 = vld [vmem:[%s2011 + $0x30] sm:$0xf]
        %v2025 = vld [vmem:[%s2011 + $0x34] sm:$0xf]
        %v2026 = vld [vmem:[%s2011 + $0x38] sm:$0xf]
        %v2027 = vld [vmem:[%s2011 + $0x3c] sm:$0xf]
        %v2028 = vld [vmem:[%s2011 + $0x40] sm:$0xf]
        %v2029 = vld [vmem:[%s2011 + $0x44] sm:$0xf]
        %v2030 = vld [vmem:[%s2011 + $0x48] sm:$0xf]
        %v2031 = vld [vmem:[%s2011 + $0x4c] sm:$0xf]
        %v2032 = vld [vmem:[%s2011 + $0x50] sm:$0xf]
        %v2033 = vld [vmem:[%s2011 + $0x54] sm:$0xf]
        %v2034 = vld [vmem:[%s2011 + $0x58] sm:$0xf]
        %v2035 = vld [vmem:[%s2011 + $0x5c] sm:$0xf]
        %v2036 = vld [vmem:[%s2011 + $0x60] sm:$0xf]
        %v2037 = vld [vmem:[%s2011 + $0x64] sm:$0xf]
        %v2038 = vld [vmem:[%s2011 + $0x68] sm:$0xf]
        %v2039 = vld [vmem:[%s2011 + $0x6c] sm:$0xf]
        %v2040 = vld [vmem:[%s2011 + $0x70] sm:$0xf]
        %v2041 = vld [vmem:[%s2011 + $0x74] sm:$0xf]
        %v2042 = vld [vmem:[%s2011 + $0x78] sm:$0xf]
        %v2043 = vld [vmem:[%s2011 + $0x7c] sm:$0xf]
        %v2044 = vld [vmem:[%s2011 + $0x80] sm:$0xf]
        %v2045 = vld [vmem:[%s2011 + $0x84] sm:$0xf]
        %v2046 = vld [vmem:[%s2011 + $0x88] sm:$0xf]
        %v2047 = vld [vmem:[%s2011 + $0x8c] sm:$0xf]
        %v2048 = vld [vmem:[%s2011 + $0x90] sm:$0xf]
        %v2049 = vld [vmem:[%s2011 + $0x94] sm:$0xf]
        %v2050 = vld [vmem:[%s2011 + $0x98] sm:$0xf]
        %v2051 = vld [vmem:[%s2011 + $0x9c] sm:$0xf]
        %v2052 = vld [vmem:[%s2011 + $0xa0] sm:$0xf]
        %v2053 = vld [vmem:[%s2011 + $0xa4] sm:$0xf]
        %v2054 = vld [vmem:[%s2011 + $0xa8] sm:$0xf]
        %v2055 = vld [vmem:[%s2011 + $0xac] sm:$0xf]
        %v2056 = vld [vmem:[%s2011 + $0xb0] sm:$0xf]
        %v2057 = vld [vmem:[%s2011 + $0xb4] sm:$0xf]
        %v2058 = vld [vmem:[%s2011 + $0xb8] sm:$0xf]
        %v2059 = vld [vmem:[%s2011 + $0xbc] sm:$0xf]
        %s2060 = scalar_lea.vmem %s6, 3
        %v2061 = vld [vmem:[%s2060] sm:$0x1]
        %v2063 = vperm.slane %v2061, 0
        %v2113 = vunpack.c.l.b16 %v2012
        %v2114 = vunpack.c.l.b16 %v2013
        %v2115 = vunpack.c.l.b16 %v2014
        %v2116 = vunpack.c.l.b16 %v2015
        %v2117 = vunpack.c.l.b16 %v2016
        %v2118 = vunpack.c.l.b16 %v2017
        %v2119 = vunpack.c.l.b16 %v2018
        %v2120 = vunpack.c.l.b16 %v2019
        %v2121 = vunpack.c.l.b16 %v2020
        %v2122 = vunpack.c.l.b16 %v2021
        %v2123 = vunpack.c.l.b16 %v2022
        %v2124 = vunpack.c.l.b16 %v2023
        %v2125 = vunpack.c.l.b16 %v2024
        %v2126 = vunpack.c.l.b16 %v2025
        %v2127 = vunpack.c.l.b16 %v2026
        %v2128 = vunpack.c.l.b16 %v2027
        %v2129 = vunpack.c.l.b16 %v2028
        %v2130 = vunpack.c.l.b16 %v2029
        %v2131 = vunpack.c.l.b16 %v2030
        %v2132 = vunpack.c.l.b16 %v2031
        %v2133 = vunpack.c.l.b16 %v2032
        %v2134 = vunpack.c.l.b16 %v2033
        %v2135 = vunpack.c.l.b16 %v2034
        %v2136 = vunpack.c.l.b16 %v2035
        %v2137 = vunpack.c.l.b16 %v2036
        %v2138 = vunpack.c.l.b16 %v2037
        %v2139 = vunpack.c.l.b16 %v2038
        %v2140 = vunpack.c.l.b16 %v2039
        %v2141 = vunpack.c.l.b16 %v2040
        %v2142 = vunpack.c.l.b16 %v2041
        %v2143 = vunpack.c.l.b16 %v2042
        %v2144 = vunpack.c.l.b16 %v2043
        %v2145 = vunpack.c.l.b16 %v2044
        %v2146 = vunpack.c.l.b16 %v2045
        %v2147 = vunpack.c.l.b16 %v2046
        %v2148 = vunpack.c.l.b16 %v2047
        %v2149 = vunpack.c.l.b16 %v2048
        %v2150 = vunpack.c.l.b16 %v2049
        %v2151 = vunpack.c.l.b16 %v2050
        %v2152 = vunpack.c.l.b16 %v2051
        %v2153 = vunpack.c.l.b16 %v2052
        %v2154 = vunpack.c.l.b16 %v2053
        %v2155 = vunpack.c.l.b16 %v2054
        %v2156 = vunpack.c.l.b16 %v2055
        %v2157 = vunpack.c.l.b16 %v2056
        %v2158 = vunpack.c.l.b16 %v2057
        %v2159 = vunpack.c.l.b16 %v2058
        %v2160 = vunpack.c.l.b16 %v2059
        %v2161 = vpack.c.b16 %v2114, %v2113
        %v2162 = vpack.c.b16 %v2116, %v2115
        %v2163 = vpack.c.b16 %v2118, %v2117
        %v2164 = vpack.c.b16 %v2120, %v2119
        %v2165 = vpack.c.b16 %v2122, %v2121
        %v2166 = vpack.c.b16 %v2124, %v2123
        %v2167 = vpack.c.b16 %v2126, %v2125
        %v2168 = vpack.c.b16 %v2128, %v2127
        %v2169 = vpack.c.b16 %v2130, %v2129
        %v2170 = vpack.c.b16 %v2132, %v2131
        %v2171 = vpack.c.b16 %v2134, %v2133
        %v2172 = vpack.c.b16 %v2136, %v2135
        %v2173 = vpack.c.b16 %v2138, %v2137
        %v2174 = vpack.c.b16 %v2140, %v2139
        %v2175 = vpack.c.b16 %v2142, %v2141
        %v2176 = vpack.c.b16 %v2144, %v2143
        %v2177 = vpack.c.b16 %v2146, %v2145
        %v2178 = vpack.c.b16 %v2148, %v2147
        %v2179 = vpack.c.b16 %v2150, %v2149
        %v2180 = vpack.c.b16 %v2152, %v2151
        %v2181 = vpack.c.b16 %v2154, %v2153
        %v2182 = vpack.c.b16 %v2156, %v2155
        %v2183 = vpack.c.b16 %v2158, %v2157
        %v2184 = vpack.c.b16 %v2160, %v2159
        %2209 = vmatpush.bf16.msra.mxu0 %v2168
        %2210 = vmatpush.bf16.msra.mxu0 %v2167
        %2211 = vmatpush.bf16.msra.mxu0 %v2166
        %2212 = vmatpush.bf16.msra.mxu0 %v2165
        %2213 = vmatpush.bf16.msra.mxu0 %v2164
        %2214 = vmatpush.bf16.msra.mxu0 %v2163
        %2215 = vmatpush.bf16.msra.mxu0 %v2162
        %2216 = vmatpush.bf16.msra.mxu0 %v2161
        %2217 = vmatmul.bf16.gmra.mxu0 %v1999
        %v2218 = vpop.f32.mrf.mxu0
        %v2219 = vadd.f32 %v2063, %v2218
        %v2220 = vpop.f32.mrf.mxu0
        %v2221 = vadd.f32 %v2063, %v2220
        %2222 = vmatmul.bf16.gmra.mxu0 %v2002
        %v2223 = vpop.f32.mrf.mxu0
        %v2224 = vadd.f32 %v2063, %v2223
        %v2225 = vpop.f32.mrf.mxu0
        %v2226 = vadd.f32 %v2063, %v2225
        %2227 = vmatmul.bf16.gmra.mxu0 %v2005
        %v2228 = vpop.f32.mrf.mxu0
        %v2229 = vadd.f32 %v2063, %v2228
        %v2230 = vpop.f32.mrf.mxu0
        %v2231 = vadd.f32 %v2063, %v2230
        %2232 = vmatmul.bf16.gmra.mxu0 %v2008
        %v2233 = vpop.f32.mrf.mxu0
        %v2234 = vadd.f32 %v2063, %v2233
        %v2235 = vpop.f32.mrf.mxu0
        %v2236 = vadd.f32 %v2063, %v2235
        %2237 = vdwg.mxu0
        %2238 = vmatpush.bf16.msra.mxu0 %v2176
        %2239 = vmatpush.bf16.msra.mxu0 %v2175
        %2240 = vmatpush.bf16.msra.mxu0 %v2174
        %2241 = vmatpush.bf16.msra.mxu0 %v2173
        %2242 = vmatpush.bf16.msra.mxu0 %v2172
        %2243 = vmatpush.bf16.msra.mxu0 %v2171
        %2244 = vmatpush.bf16.msra.mxu0 %v2170
        %2245 = vmatpush.bf16.msra.mxu0 %v2169
        %2246 = vmatmul.bf16.gmra.mxu0 %v2000
        %v2247 = vpop.f32.mrf.mxu0
        %v2248 = vadd.f32 %v2219, %v2247
        %v2249 = vpop.f32.mrf.mxu0
        %v2250 = vadd.f32 %v2221, %v2249
        %2251 = vmatmul.bf16.gmra.mxu0 %v2003
        %v2252 = vpop.f32.mrf.mxu0
        %v2253 = vadd.f32 %v2224, %v2252
        %v2254 = vpop.f32.mrf.mxu0
        %v2255 = vadd.f32 %v2226, %v2254
        %2256 = vmatmul.bf16.gmra.mxu0 %v2006
        %v2257 = vpop.f32.mrf.mxu0
        %v2258 = vadd.f32 %v2229, %v2257
        %v2259 = vpop.f32.mrf.mxu0
        %v2260 = vadd.f32 %v2231, %v2259
        %2261 = vmatmul.bf16.gmra.mxu0 %v2009
        %v2262 = vpop.f32.mrf.mxu0
        %v2263 = vadd.f32 %v2234, %v2262
        %v2264 = vpop.f32.mrf.mxu0
        %v2265 = vadd.f32 %v2236, %v2264
        %2266 = vdwg.mxu0
        %2267 = vmatpush.bf16.msra.mxu0 %v2184
        %2268 = vmatpush.bf16.msra.mxu0 %v2183
        %2269 = vmatpush.bf16.msra.mxu0 %v2182
        %2270 = vmatpush.bf16.msra.mxu0 %v2181
        %2271 = vmatpush.bf16.msra.mxu0 %v2180
        %2272 = vmatpush.bf16.msra.mxu0 %v2179
        %2273 = vmatpush.bf16.msra.mxu0 %v2178
        %2274 = vmatpush.bf16.msra.mxu0 %v2177
        %2275 = vmatmul.bf16.gmra.mxu0 %v2001
        %v2276 = vpop.f32.mrf.mxu0
        %v2277 = vadd.f32 %v2248, %v2276
        %v2278 = vpop.f32.mrf.mxu0
        %v2279 = vadd.f32 %v2250, %v2278
        %2280 = vmatmul.bf16.gmra.mxu0 %v2004
        %v2281 = vpop.f32.mrf.mxu0
        %v2282 = vadd.f32 %v2253, %v2281
        %v2283 = vpop.f32.mrf.mxu0
        %v2284 = vadd.f32 %v2255, %v2283
        %2285 = vmatmul.bf16.gmra.mxu0 %v2007
        %v2286 = vpop.f32.mrf.mxu0
        %v2287 = vadd.f32 %v2258, %v2286
        %v2288 = vpop.f32.mrf.mxu0
        %v2289 = vadd.f32 %v2260, %v2288
        %2290 = vmatmul.bf16.gmra.mxu0 %v2010
        %v2291 = vpop.f32.mrf.mxu0
        %v2292 = vadd.f32 %v2263, %v2291
        %v2293 = vpop.f32.mrf.mxu0
        %v2294 = vadd.f32 %v2265, %v2293
        %2295 = vdwg.mxu0
        %v2296 = vadd.f32 %v2277, %v635
        %v2297 = vadd.f32 %v2279, %v637
        %v2298 = vadd.f32 %v2282, %v640
        %v2299 = vadd.f32 %v2284, %v642
        %v2300 = vadd.f32 %v2287, %v645
        %v2301 = vadd.f32 %v2289, %v647
        %v2302 = vadd.f32 %v2292, %v650
        %v2303 = vadd.f32 %v2294, %v652
        %s2304 = scalar_lea.vmem %s408, 16 [#allocation13]
        %2305 = vst [vmem:[%s2304] sm:$0xff] %v2296
        %2306 = vst [vmem:[%s2304 + $0x8] sm:$0xff] %v2297
        %2307 = vst [vmem:[%s2304 + $0x40] sm:$0xff] %v2298
        %2308 = vst [vmem:[%s2304 + $0x48] sm:$0xff] %v2299
        %2309 = vst [vmem:[%s2304 + $0x80] sm:$0xff] %v2300
        %2310 = vst [vmem:[%s2304 + $0x88] sm:$0xff] %v2301
        %2311 = vst [vmem:[%s2304 + $0xc0] sm:$0xff] %v2302
        %2312 = vst [vmem:[%s2304 + $0xc8] sm:$0xff] %v2303
        %v2321 = vrot.slane %v753, 7
        %v2322 = vrot.slane %v755, 7
        %v2323 = vsel %vm788, %v2321, %v2322
        %v2324 = vrot.slane %v758, 7
        %v2325 = vsel %vm788, %v2322, %v2324
        %v2326 = vrot.slane %v760, 7
        %v2327 = vsel %vm788, %v2324, %v2326
        %v2328 = vrot.slane %v763, 7
        %v2329 = vsel %vm788, %v2326, %v2328
        %v2330 = vrot.slane %v765, 7
        %v2331 = vsel %vm788, %v2328, %v2330
        %v2332 = vrot.slane %v768, 7
        %v2333 = vsel %vm788, %v2330, %v2332
        %v2334 = vrot.slane %v770, 7
        %v2335 = vsel %vm788, %v2332, %v2334
        %v2344 = vsel %vm788, 0.0, %v2321
        %v2345 = vrot.slane %v753, 1
        %v2346 = vrot.slane %v755, 1
        %v2347 = vsel %vm813, %v2345, %v2346
        %v2348 = vrot.slane %v758, 1
        %v2349 = vsel %vm813, %v2346, %v2348
        %v2350 = vrot.slane %v760, 1
        %v2351 = vsel %vm813, %v2348, %v2350
        %v2352 = vrot.slane %v763, 1
        %v2353 = vsel %vm813, %v2350, %v2352
        %v2354 = vrot.slane %v765, 1
        %v2355 = vsel %vm813, %v2352, %v2354
        %v2356 = vrot.slane %v768, 1
        %v2357 = vsel %vm813, %v2354, %v2356
        %v2358 = vrot.slane %v770, 1
        %v2359 = vsel %vm813, %v2356, %v2358
        %v2368 = vsel %vm813, %v2358, 0.0
        %v2369 = vsel %vm519, 0.0, %v2344
        %v2370 = vsel %vm520, 0.0, %v2323
        %v2371 = vsel %vm521, 0.0, %v2325
        %v2372 = vsel %vm522, 0.0, %v2327
        %v2373 = vsel %vm523, 0.0, %v2329
        %v2374 = vsel %vm524, 0.0, %v2331
        %v2375 = vsel %vm525, 0.0, %v2333
        %v2376 = vsel %vm526, 0.0, %v2335
        %v2377 = vsel %vm527, 0.0, %v2347
        %v2378 = vsel %vm528, 0.0, %v2349
        %v2379 = vsel %vm529, 0.0, %v2351
        %v2380 = vsel %vm530, 0.0, %v2353
        %v2381 = vsel %vm531, 0.0, %v2355
        %v2382 = vsel %vm532, 0.0, %v2357
        %v2383 = vsel %vm533, 0.0, %v2359
        %v2384 = vsel %vm534, 0.0, %v2368
        %v2385 = vadd.f32 %v2369, %v753
        %v2386 = vadd.f32 %v2370, %v755
        %v2387 = vadd.f32 %v2371, %v758
        %v2388 = vadd.f32 %v2372, %v760
        %v2389 = vadd.f32 %v2373, %v763
        %v2390 = vadd.f32 %v2374, %v765
        %v2391 = vadd.f32 %v2375, %v768
        %v2392 = vadd.f32 %v2376, %v770
        %v2393 = vadd.f32 %v2385, %v2377
        %v2394 = vadd.f32 %v2386, %v2378
        %v2395 = vadd.f32 %v2387, %v2379
        %v2396 = vadd.f32 %v2388, %v2380
        %v2397 = vadd.f32 %v2389, %v2381
        %v2398 = vadd.f32 %v2390, %v2382
        %v2399 = vadd.f32 %v2391, %v2383
        %v2400 = vadd.f32 %v2392, %v2384
        %2409 = vrot.lane.b32.xlu0 %v2393, 8
        %v2410 = vpop.permute.xlu0 %2409
        %2411 = vrot.lane.b32.xlu0 %v2394, 8
        %v2412 = vpop.permute.xlu0 %2411
        %2413 = vrot.lane.b32.xlu0 %v2395, 8
        %v2414 = vpop.permute.xlu0 %2413
        %2415 = vrot.lane.b32.xlu0 %v2396, 8
        %v2416 = vpop.permute.xlu0 %2415
        %2417 = vrot.lane.b32.xlu0 %v2397, 8
        %v2418 = vpop.permute.xlu0 %2417
        %2419 = vrot.lane.b32.xlu0 %v2398, 8
        %v2420 = vpop.permute.xlu0 %2419
        %2421 = vrot.lane.b32.xlu0 %v2399, 8
        %v2422 = vpop.permute.xlu0 %2421
        %2423 = vrot.lane.b32.xlu0 %v2400, 8
        %v2424 = vpop.permute.xlu0 %2423
        %vm2433 = vcmask 64512
        %v2434 = vsel %vm2433, 0.0, %v2410
        %v2435 = vsel %vm2433, 0.0, %v2412
        %v2436 = vsel %vm2433, 0.0, %v2414
        %v2437 = vsel %vm2433, 0.0, %v2416
        %v2438 = vsel %vm2433, 0.0, %v2418
        %v2439 = vsel %vm2433, 0.0, %v2420
        %v2440 = vsel %vm2433, 0.0, %v2422
        %v2441 = vsel %vm2433, 0.0, %v2424
        %2442 = vrot.lane.b32.xlu0 %v2393, 120
        %v2443 = vpop.permute.xlu0 %2442
        %2444 = vrot.lane.b32.xlu0 %v2394, 120
        %v2445 = vpop.permute.xlu0 %2444
        %2446 = vrot.lane.b32.xlu0 %v2395, 120
        %v2447 = vpop.permute.xlu0 %2446
        %2448 = vrot.lane.b32.xlu0 %v2396, 120
        %v2449 = vpop.permute.xlu0 %2448
        %2450 = vrot.lane.b32.xlu0 %v2397, 120
        %v2451 = vpop.permute.xlu0 %2450
        %2452 = vrot.lane.b32.xlu0 %v2398, 120
        %v2453 = vpop.permute.xlu0 %2452
        %2454 = vrot.lane.b32.xlu0 %v2399, 120
        %v2455 = vpop.permute.xlu0 %2454
        %2456 = vrot.lane.b32.xlu0 %v2400, 120
        %v2457 = vpop.permute.xlu0 %2456
        %vm2466 = vcmask 982016
        %v2467 = vsel %vm2466, %v2443, 0.0
        %v2468 = vsel %vm2466, %v2445, 0.0
        %v2469 = vsel %vm2466, %v2447, 0.0
        %v2470 = vsel %vm2466, %v2449, 0.0
        %v2471 = vsel %vm2466, %v2451, 0.0
        %v2472 = vsel %vm2466, %v2453, 0.0
        %v2473 = vsel %vm2466, %v2455, 0.0
        %v2474 = vsel %vm2466, %v2457, 0.0
        %v2475 = vadd.f32 %v2434, %v2393
        %v2476 = vadd.f32 %v2435, %v2394
        %v2477 = vadd.f32 %v2436, %v2395
        %v2478 = vadd.f32 %v2437, %v2396
        %v2479 = vadd.f32 %v2438, %v2397
        %v2480 = vadd.f32 %v2439, %v2398
        %v2481 = vadd.f32 %v2440, %v2399
        %v2482 = vadd.f32 %v2441, %v2400
        %v2483 = vadd.f32 %v2475, %v2467
        %v2484 = vadd.f32 %v2476, %v2468
        %v2485 = vadd.f32 %v2477, %v2469
        %v2486 = vadd.f32 %v2478, %v2470
        %v2487 = vadd.f32 %v2479, %v2471
        %v2488 = vadd.f32 %v2480, %v2472
        %v2489 = vadd.f32 %v2481, %v2473
        %v2490 = vadd.f32 %v2482, %v2474
        %vm2491 = vmor %vm519, %vm527
        %vm2492 = vmor %vm520, %vm528
        %vm2493 = vmor %vm521, %vm529
        %vm2494 = vmor %vm522, %vm530
        %vm2495 = vmor %vm523, %vm531
        %vm2496 = vmor %vm524, %vm532
        %vm2497 = vmor %vm525, %vm533
        %vm2498 = vmor %vm526, %vm534
        %v2499 = vsel %vm2491, 0.5, 0.33333334
        %v2500 = vsel %vm2492, 0.5, 0.33333334
        %v2501 = vsel %vm2493, 0.5, 0.33333334
        %v2502 = vsel %vm2494, 0.5, 0.33333334
        %v2503 = vsel %vm2495, 0.5, 0.33333334
        %v2504 = vsel %vm2496, 0.5, 0.33333334
        %v2505 = vsel %vm2497, 0.5, 0.33333334
        %v2506 = vsel %vm2498, 0.5, 0.33333334
        %vm2507 = vmor %vm535, %vm536
        %v2508 = vsel %vm2507, 0.5, 0.33333334
        %v2509 = vmul.f32 %v2499, %v2508
        %v2510 = vmul.f32 %v2500, %v2508
        %v2511 = vmul.f32 %v2501, %v2508
        %v2512 = vmul.f32 %v2502, %v2508
        %v2513 = vmul.f32 %v2503, %v2508
        %v2514 = vmul.f32 %v2504, %v2508
        %v2515 = vmul.f32 %v2505, %v2508
        %v2516 = vmul.f32 %v2506, %v2508
        %v2517 = vmul.f32 %v2483, %v2509
        %v2518 = vmul.f32 %v2484, %v2510
        %v2519 = vmul.f32 %v2485, %v2511
        %v2520 = vmul.f32 %v2486, %v2512
        %v2521 = vmul.f32 %v2487, %v2513
        %v2522 = vmul.f32 %v2488, %v2514
        %v2523 = vmul.f32 %v2489, %v2515
        %v2524 = vmul.f32 %v2490, %v2516
        %v2525 = vadd.f32 %v2517, %v635
        %v2526 = vadd.f32 %v2518, %v637
        %v2527 = vadd.f32 %v2519, %v640
        %v2528 = vadd.f32 %v2520, %v642
        %v2529 = vadd.f32 %v2521, %v645
        %v2530 = vadd.f32 %v2522, %v647
        %v2531 = vadd.f32 %v2523, %v650
        %v2532 = vadd.f32 %v2524, %v652
        %s2533 = scalar_lea.vmem %s408, 32 [#allocation13]
        %2534 = vst [vmem:[%s2533] sm:$0xff] %v2525
        %2535 = vst [vmem:[%s2533 + $0x8] sm:$0xff] %v2526
        %2536 = vst [vmem:[%s2533 + $0x40] sm:$0xff] %v2527
        %2537 = vst [vmem:[%s2533 + $0x48] sm:$0xff] %v2528
        %2538 = vst [vmem:[%s2533 + $0x80] sm:$0xff] %v2529
        %2539 = vst [vmem:[%s2533 + $0x88] sm:$0xff] %v2530
        %2540 = vst [vmem:[%s2533 + $0xc0] sm:$0xff] %v2531
        %2541 = vst [vmem:[%s2533 + $0xc8] sm:$0xff] %v2532
        %v2550 = vrot.slane %v635, 7
        %v2551 = vrot.slane %v637, 7
        %v2552 = vsel %vm788, %v2550, %v2551
        %v2553 = vrot.slane %v640, 7
        %v2554 = vsel %vm788, %v2551, %v2553
        %v2555 = vrot.slane %v642, 7
        %v2556 = vsel %vm788, %v2553, %v2555
        %v2557 = vrot.slane %v645, 7
        %v2558 = vsel %vm788, %v2555, %v2557
        %v2559 = vrot.slane %v647, 7
        %v2560 = vsel %vm788, %v2557, %v2559
        %v2561 = vrot.slane %v650, 7
        %v2562 = vsel %vm788, %v2559, %v2561
        %v2563 = vrot.slane %v652, 7
        %v2564 = vsel %vm788, %v2561, %v2563
        %v2573 = vsel %vm788, -inf, %v2550
        %v2574 = vrot.slane %v635, 1
        %v2575 = vrot.slane %v637, 1
        %v2576 = vsel %vm813, %v2574, %v2575
        %v2577 = vrot.slane %v640, 1
        %v2578 = vsel %vm813, %v2575, %v2577
        %v2579 = vrot.slane %v642, 1
        %v2580 = vsel %vm813, %v2577, %v2579
        %v2581 = vrot.slane %v645, 1
        %v2582 = vsel %vm813, %v2579, %v2581
        %v2583 = vrot.slane %v647, 1
        %v2584 = vsel %vm813, %v2581, %v2583
        %v2585 = vrot.slane %v650, 1
        %v2586 = vsel %vm813, %v2583, %v2585
        %v2587 = vrot.slane %v652, 1
        %v2588 = vsel %vm813, %v2585, %v2587
        %v2597 = vsel %vm813, %v2587, -inf
        %v2598 = vsel %vm519, -inf, %v2573
        %v2599 = vsel %vm520, -inf, %v2552
        %v2600 = vsel %vm521, -inf, %v2554
        %v2601 = vsel %vm522, -inf, %v2556
        %v2602 = vsel %vm523, -inf, %v2558
        %v2603 = vsel %vm524, -inf, %v2560
        %v2604 = vsel %vm525, -inf, %v2562
        %v2605 = vsel %vm526, -inf, %v2564
        %v2606 = vsel %vm527, -inf, %v2576
        %v2607 = vsel %vm528, -inf, %v2578
        %v2608 = vsel %vm529, -inf, %v2580
        %v2609 = vsel %vm530, -inf, %v2582
        %v2610 = vsel %vm531, -inf, %v2584
        %v2611 = vsel %vm532, -inf, %v2586
        %v2612 = vsel %vm533, -inf, %v2588
        %v2613 = vsel %vm534, -inf, %v2597
        %v2614 = vmax.f32 %v2598, %v635
        %v2615 = vmax.f32 %v2599, %v637
        %v2616 = vmax.f32 %v2600, %v640
        %v2617 = vmax.f32 %v2601, %v642
        %v2618 = vmax.f32 %v2602, %v645
        %v2619 = vmax.f32 %v2603, %v647
        %v2620 = vmax.f32 %v2604, %v650
        %v2621 = vmax.f32 %v2605, %v652
        %v2622 = vmax.f32 %v2614, %v2606
        %v2623 = vmax.f32 %v2615, %v2607
        %v2624 = vmax.f32 %v2616, %v2608
        %v2625 = vmax.f32 %v2617, %v2609
        %v2626 = vmax.f32 %v2618, %v2610
        %v2627 = vmax.f32 %v2619, %v2611
        %v2628 = vmax.f32 %v2620, %v2612
        %v2629 = vmax.f32 %v2621, %v2613
        %2638 = vrot.lane.b32.xlu0 %v2622, 8
        %v2639 = vpop.permute.xlu0 %2638
        %2640 = vrot.lane.b32.xlu0 %v2623, 8
        %v2641 = vpop.permute.xlu0 %2640
        %2642 = vrot.lane.b32.xlu0 %v2624, 8
        %v2643 = vpop.permute.xlu0 %2642
        %2644 = vrot.lane.b32.xlu0 %v2625, 8
        %v2645 = vpop.permute.xlu0 %2644
        %2646 = vrot.lane.b32.xlu0 %v2626, 8
        %v2647 = vpop.permute.xlu0 %2646
        %2648 = vrot.lane.b32.xlu0 %v2627, 8
        %v2649 = vpop.permute.xlu0 %2648
        %2650 = vrot.lane.b32.xlu0 %v2628, 8
        %v2651 = vpop.permute.xlu0 %2650
        %2652 = vrot.lane.b32.xlu0 %v2629, 8
        %v2653 = vpop.permute.xlu0 %2652
        %v2662 = vsel %vm2433, -inf, %v2639
        %v2663 = vsel %vm2433, -inf, %v2641
        %v2664 = vsel %vm2433, -inf, %v2643
        %v2665 = vsel %vm2433, -inf, %v2645
        %v2666 = vsel %vm2433, -inf, %v2647
        %v2667 = vsel %vm2433, -inf, %v2649
        %v2668 = vsel %vm2433, -inf, %v2651
        %v2669 = vsel %vm2433, -inf, %v2653
        %2670 = vrot.lane.b32.xlu0 %v2622, 120
        %v2671 = vpop.permute.xlu0 %2670
        %2672 = vrot.lane.b32.xlu0 %v2623, 120
        %v2673 = vpop.permute.xlu0 %2672
        %2674 = vrot.lane.b32.xlu0 %v2624, 120
        %v2675 = vpop.permute.xlu0 %2674
        %2676 = vrot.lane.b32.xlu0 %v2625, 120
        %v2677 = vpop.permute.xlu0 %2676
        %2678 = vrot.lane.b32.xlu0 %v2626, 120
        %v2679 = vpop.permute.xlu0 %2678
        %2680 = vrot.lane.b32.xlu0 %v2627, 120
        %v2681 = vpop.permute.xlu0 %2680
        %2682 = vrot.lane.b32.xlu0 %v2628, 120
        %v2683 = vpop.permute.xlu0 %2682
        %2684 = vrot.lane.b32.xlu0 %v2629, 120
        %v2685 = vpop.permute.xlu0 %2684
        %v2694 = vsel %vm2466, %v2671, -inf
        %v2695 = vsel %vm2466, %v2673, -inf
        %v2696 = vsel %vm2466, %v2675, -inf
        %v2697 = vsel %vm2466, %v2677, -inf
        %v2698 = vsel %vm2466, %v2679, -inf
        %v2699 = vsel %vm2466, %v2681, -inf
        %v2700 = vsel %vm2466, %v2683, -inf
        %v2701 = vsel %vm2466, %v2685, -inf
        %v2702 = vmax.f32 %v2662, %v2622
        %v2703 = vmax.f32 %v2663, %v2623
        %v2704 = vmax.f32 %v2664, %v2624
        %v2705 = vmax.f32 %v2665, %v2625
        %v2706 = vmax.f32 %v2666, %v2626
        %v2707 = vmax.f32 %v2667, %v2627
        %v2708 = vmax.f32 %v2668, %v2628
        %v2709 = vmax.f32 %v2669, %v2629
        %v2710 = vmax.f32 %v2702, %v2694
        %v2711 = vmax.f32 %v2703, %v2695
        %v2712 = vmax.f32 %v2704, %v2696
        %v2713 = vmax.f32 %v2705, %v2697
        %v2714 = vmax.f32 %v2706, %v2698
        %v2715 = vmax.f32 %v2707, %v2699
        %v2716 = vmax.f32 %v2708, %v2700
        %v2717 = vmax.f32 %v2709, %v2701
        %v2718 = vld [vmem:[%s408] sm:$0xff]
        %v2719 = vld [vmem:[%s408 + $0x8] sm:$0xff]
        %v2720 = vld [vmem:[%s408 + $0x40] sm:$0xff]
        %v2721 = vld [vmem:[%s408 + $0x48] sm:$0xff]
        %v2722 = vld [vmem:[%s408 + $0x80] sm:$0xff]
        %v2723 = vld [vmem:[%s408 + $0x88] sm:$0xff]
        %v2724 = vld [vmem:[%s408 + $0xc0] sm:$0xff]
        %v2725 = vld [vmem:[%s408 + $0xc8] sm:$0xff]
        %v2726 = vadd.f32 %v2710, %v2718
        %v2727 = vadd.f32 %v2711, %v2719
        %v2728 = vadd.f32 %v2712, %v2720
        %v2729 = vadd.f32 %v2713, %v2721
        %v2730 = vadd.f32 %v2714, %v2722
        %v2731 = vadd.f32 %v2715, %v2723
        %v2732 = vadd.f32 %v2716, %v2724
        %v2733 = vadd.f32 %v2717, %v2725
        %s2734 = scalar_lea.vmem %s408, 48 [#allocation13]
        %2735 = vst [vmem:[%s2734] sm:$0xff] %v2726
        %2736 = vst [vmem:[%s2734 + $0x8] sm:$0xff] %v2727
        %2737 = vst [vmem:[%s2734 + $0x40] sm:$0xff] %v2728
        %2738 = vst [vmem:[%s2734 + $0x48] sm:$0xff] %v2729
        %2739 = vst [vmem:[%s2734 + $0x80] sm:$0xff] %v2730
        %2740 = vst [vmem:[%s2734 + $0x88] sm:$0xff] %v2731
        %2741 = vst [vmem:[%s2734 + $0xc0] sm:$0xff] %v2732
        %2742 = vst [vmem:[%s2734 + $0xc8] sm:$0xff] %v2733
        %s2743 = sand.u32 %s194, 1
        %s2744 = scalar_lea.sflag [#allocation4], %s2743
        %s2745 = sand.u32 %s194, 1
        %s2746 = smul.addr %s2745, 256
        %s2747 = scalar_lea.vmem [#allocation13], %s2746
        // Predicated region
        $region73: #{tpu_custom_call.1} parent=47 // pred_check
          %p2748 = pneg %p204
        $region74: #{tpu_custom_call.1} parent=47 // pred_check_branch
          %2750 = sbr.rel (%p2748) target = $region76
        $region75: #{tpu_custom_call.1} parent=47 // pred_region
          %s2751 = smul.u32 4, %s29
          %2753 = vsyncadd %s2744, 0
          %s2754 = smul.addr %s2751, 8
          %s2755 = smul.addr %s2754, 8
          %s2756 = scalar_lea.hbm %s7, %s2755
          %s2757 = sshll.u32 %s2747, 4
          %s2758 = int_to_ptr.vmem [resolvable:$true] %s2757
          %s2759 = sshll.u32 %s2756, 4
          %s2760 = int_to_ptr.hbm [resolvable:$true] %s2759
          %2765 = dma.vmem_to_hbm [thread:$0]  %s2758, 4096, %s2760, %s2744, 128, 128, 8
        $region76: #{tpu_custom_call.1} parent=47 // pred_fallthru
          _
      $region48: #{tpu_custom_call.1} parent=5 // pred_fallthru
        _
      %p2766 = scmp.le.s32.totalorder 2, %s24
      // Predicated region
      $region77: #{tpu_custom_call.1} parent=5 // pred_check
        %p2767 = pneg %p2766
      $region78: #{tpu_custom_call.1} parent=5 // pred_check_branch
        %2769 = sbr.rel (%p2767) target = $region80
      $region79: #{tpu_custom_call.1} parent=5 // pred_region
        %s2770 = ssub.s32 %s24, 2
        // Predicated region
        $region81: #{tpu_custom_call.1} parent=79 // pred_check
          %p2771 = pneg %p210
        $region82: #{tpu_custom_call.1} parent=79 // pred_check_branch
          %2773 = sbr.rel (%p2771) target = $region84
        $region83: #{tpu_custom_call.1} parent=79 // pred_region
          %s2774 = sand.u32 %s195, 1
          %s2775 = scalar_lea.sflag [#allocation4], %s2774
          %s2776 = sand.u32 %s195, 1
          %s2777 = smul.addr %s2776, 256
          %s2778 = scalar_lea.vmem [#allocation13], %s2777
          %2780 = dma.done %s2775, 4096
        $region84: #{tpu_custom_call.1} parent=79 // pred_fallthru
          _
      $region80: #{tpu_custom_call.1} parent=5 // pred_fallthru
        _
    $region6: #{tpu_custom_call.1} parent=1 // loop_footer
      %s28 = sadd.s32 1, %s24
    $region7: #{tpu_custom_call.1} parent=1 // loop_footer_branch
      %23 = sbr.rel target = $region3
    $region8: #{tpu_custom_call.1} parent=1 // loop_exit
      _
    %2781 = vsyncpa [#allocation3], 1
    %s2782 = scalar_lea.sflag [#allocation3], 1
    %2783 = vsyncpa %s2782, 1
    %2784 = vsyncpa [#allocation6], 1
    %s2785 = scalar_lea.sflag [#allocation6], 1
    %2786 = vsyncpa %s2785, 1
    %2787 = vsyncpa [#allocation9], 1
    %2788 = vsyncpa [#allocation12], 1
    %2789 = vsyncpa [#allocation4], 1
    %s2790 = scalar_lea.sflag [#allocation4], 1
    %2791 = vsyncpa %s2790, 1

</llo_original>
